<compile_context>
chip_gen: v7x
topology: tpu7x:2x2x1
jax: 0.10.0
libtpu: 0.0.40
codegen_flags: <defaults>
</compile_context>

<pallas_src>
import functools

import jax
import jax.numpy as jnp
from jax.experimental import pallas as pl
from jax.experimental.pallas import tpu as pltpu


def _tree_sum(parts):
    """Balanced-tree sum: keeps the partial products independent so the VLIW
    scheduler can pack the adds instead of serializing on one accumulator."""
    parts = list(parts)
    while len(parts) > 1:
        nxt = [parts[i] + parts[i + 1] for i in range(0, len(parts) - 1, 2)]
        if len(parts) % 2:
            nxt.append(parts[-1])
        parts = nxt
    return parts[0]


def _lka_kernel(x_ref, s1_ref, a0_ref, b0_ref, s2_ref, a2_ref, bf_ref, o_ref,
                *, R, K1, K2):
    # x_ref  : (R, WC)        R = batch_tile * H rows, lane-dense packed layout
    # s1_ref : (K1*R, R)      stacked masked vertical-shift matrices (stage 1)
    # a0_ref : (K1, WC, WC)   banded horizontal-tap matrices (stage 1)
    # b0_ref : (1, WC)        stage-1 bias row
    # s2_ref : (K2*R, R)      stacked masked vertical-shift matrices (stage 2)
    # a2_ref : (K2, WC, WC)   banded matrices (stage 2), pre-fused with 1x1 conv
    # bf_ref : (1, WC)        fused stage-2 + 1x1 bias row
    x = x_ref[...]

    def stage(inp, s_ref, a_ref, bias_row, K):
        # All vertical taps (and height/batch boundary zeroing) in ONE matmul.
        xs = jnp.dot(s_ref[...], inp, preferred_element_type=jnp.float32)
        # Independent per-vertical-tap banded matmuls (horizontal taps,
        # per-channel weights and width zero-padding are inside a_ref[k]).
        parts = [
            jnp.dot(xs[k * R:(k + 1) * R, :], a_ref[k],
                    preferred_element_type=jnp.float32)
            for k in range(K)
        ]
        return bias_row + _tree_sum(parts)

    a = stage(x, s1_ref, a0_ref, b0_ref[...], K1)       # depthwise 5x5, pad 2
    attn = stage(a, s2_ref, a2_ref, bf_ref[...], K2)    # dw 7x7 dil3 + 1x1 fused

    # u * attn + shortcut  ==  x * (attn + 1)
    o_ref[...] = (x * (attn + 1.0)).astype(o_ref.dtype)


def _hshift_mat(W, dx):
    """M[wi, wo] = 1 if wi == wo + dx (taps leaving [0, W) have no row)."""
    wi = jnp.arange(W)[:, None]
    wo = jnp.arange(W)[None, :]
    return (wi == wo + dx).astype(jnp.float32)


def _vshift_mat(H, dy):
    """S[h_out, h_in] = 1 if h_in == h_out + dy (rows leaving the image -> 0)."""
    ho = jnp.arange(H)[:, None]
    hi = jnp.arange(H)[None, :]
    return (hi == ho + dy).astype(jnp.float32)


def _banded_tap_matrices(w, *, K, dil, pad, W):
    """(C, K, K) depthwise weight -> (K, W*C, W*C).  Matrix ki encodes every
    horizontal tap kj as a banded block (per-channel weights on the diagonal
    of each block); taps outside the image width are implicitly zero."""
    mats = []
    for ki in range(K):
        A = jnp.zeros((W * w.shape[0], W * w.shape[0]), jnp.float32)
        for kj in range(K):
            dx = kj * dil - pad
            A = A + jnp.kron(_hshift_mat(W, dx),
                             jnp.diag(w[:, ki, kj].astype(jnp.float32)))
        mats.append(A)
    return jnp.stack(mats)                     # (K, WC, WC)


def _stacked_vshift(H, BT, *, K, dil, pad):
    """Stacked, batch-block-diagonal masked vertical-shift matrices of shape
    (K*BT*H, BT*H): row block ki shifts each batch element's rows by
    dy = ki*dil - pad and zeroes rows whose source leaves the image/batch."""
    eye_b = jnp.eye(BT, dtype=jnp.float32)
    blocks = [jnp.kron(eye_b, _vshift_mat(H, ki * dil - pad)) for ki in range(K)]
    return jnp.concatenate(blocks, axis=0)


def spatial_attention(x, w0, b0, wsp, bsp, w1, b1, *, batch_tile=None):
    """x: (B, H, W, C) float32 (NHWC); here W*C is a multiple of 128.
    Weights use PyTorch shapes (squeezed):
       w0: (C,5,5)  b0: (C,)  wsp: (C,7,7)  bsp: (C,)  w1: (C_out,C_in)  b1: (C,)"""
    B, H, W, C = x.shape
    WC = W * C
    if batch_tile is None:
        batch_tile = B              # collapse batch: tiny bodies are overhead-bound
    BT = batch_tile
    assert B % BT == 0
    R = BT * H
    NG = B // BT

    x_flat = x.reshape(B * H, WC)                                    # lane-dense

    # ---- Stage 1: depthwise 5x5, dilation 1, pad 2 --------------------------
    s1 = _stacked_vshift(H, BT, K=5, dil=1, pad=2)                   # (5R, R)
    a0 = _banded_tap_matrices(w0, K=5, dil=1, pad=2, W=W)            # (5, WC, WC)
    b0row = jnp.tile(b0.astype(jnp.float32), W).reshape(1, WC)

    # ---- Stage 2: depthwise 7x7, dilation 3, pad 9, fused with the 1x1 ------
    # Block-diagonal 1x1 weight: big[wi*C+ci, wo*C+co] = (wi==wo) * w1[co, ci]
    w1_big = jnp.einsum('ab,oc->acbo', jnp.eye(W, dtype=jnp.float32),
                        w1.astype(jnp.float32)).reshape(WC, WC)
    s2 = _stacked_vshift(H, BT, K=7, dil=3, pad=9)                   # (7R, R)
    asp = _banded_tap_matrices(wsp, K=7, dil=3, pad=9, W=W)          # (7, WC, WC)
    a2 = jnp.einsum('kij,jl->kil', asp, w1_big)                      # fold 1x1 in
    bfin = jnp.tile(w1.astype(jnp.float32) @ bsp.astype(jnp.float32)
                    + b1.astype(jnp.float32), W).reshape(1, WC)

    kernel = functools.partial(_lka_kernel, R=R, K1=5, K2=7)

    out = pl.pallas_call(
        kernel,
        out_shape=jax.ShapeDtypeStruct((B * H, WC), x.dtype),
        grid_spec=pltpu.PrefetchScalarGridSpec(
            num_scalar_prefetch=0,
            grid=(NG,),
            in_specs=[
                pl.BlockSpec((R, WC), lambda g: (g, 0)),
                pl.BlockSpec((5 * R, R), lambda g: (0, 0)),
                pl.BlockSpec((5, WC, WC), lambda g: (0, 0, 0)),
                pl.BlockSpec((1, WC), lambda g: (0, 0)),
                pl.BlockSpec((7 * R, R), lambda g: (0, 0)),
                pl.BlockSpec((7, WC, WC), lambda g: (0, 0, 0)),
                pl.BlockSpec((1, WC), lambda g: (0, 0)),
            ],
            out_specs=pl.BlockSpec((R, WC), lambda g: (g, 0)),
        ),
        compiler_params=pltpu.CompilerParams(
            dimension_semantics=("parallel",),
            vmem_limit_bytes=32 * 1024 * 1024),
    )(x_flat, s1, a0, b0row, s2, a2, bfin)

    return out.reshape(B, H, W, C)


def ref_spatial_attention(x, w0, b0, wsp, bsp, w1, b1):
    """Pure-JAX reference (NHWC) mirroring the PyTorch module."""
    C = x.shape[-1]
    dn = ('NHWC', 'HWIO', 'NHWC')
    hp = jax.lax.Precision.HIGHEST
    # depthwise 5x5, pad 2
    a = jax.lax.conv_general_dilated(
        x, jnp.transpose(w0, (1, 2, 0))[:, :, None, :],
        window_strides=(1, 1), padding=((2, 2), (2, 2)),
        dimension_numbers=dn, feature_group_count=C, precision=hp) + b0
    # depthwise 7x7, dilation 3, pad 9
    a = jax.lax.conv_general_dilated(
        a, jnp.transpose(wsp, (1, 2, 0))[:, :, None, :],
        window_strides=(1, 1), padding=((9, 9), (9, 9)),
        rhs_dilation=(3, 3),
        dimension_numbers=dn, feature_group_count=C, precision=hp) + bsp
    # 1x1 conv
    attn = jnp.einsum('bhwc,oc->bhwo', a, w1, precision=hp) + b1
    return x * attn + x


if __name__ == "__main__":
    B, H, W, C = 2, 16, 16, 8   # W*C = 128 -> fully lane-dense; d_model = C = 8

    key = jax.random.PRNGKey(0)
    ks = jax.random.split(key, 7)
    x = jax.random.normal(ks[0], (B, H, W, C), jnp.float32)
    # Deterministic synthetic parameters (PyTorch shapes, squeezed):
    w0 = jax.random.normal(ks[1], (C, 5, 5), jnp.float32) * 0.1    # conv0 (depthwise 5x5)
    b0 = jax.random.normal(ks[2], (C,), jnp.float32) * 0.1
    wsp = jax.random.normal(ks[3], (C, 7, 7), jnp.float32) * 0.05  # conv_spatial (7x7, dil 3)
    bsp = jax.random.normal(ks[4], (C,), jnp.float32) * 0.1
    w1 = jax.random.normal(ks[5], (C, C), jnp.float32) * 0.2       # conv1 (1x1)
    b1 = jax.random.normal(ks[6], (C,), jnp.float32) * 0.1

    out = spatial_attention(x, w0, b0, wsp, bsp, w1, b1)
    out = jax.block_until_ready(out)

    ref = ref_spatial_attention(x, w0, b0, wsp, bsp, w1, b1)
    assert out.shape == (B, H, W, C)
    assert jnp.allclose(out, ref, atol=1e-3, rtol=1e-3), "mismatch vs reference"

    print("KERNEL_OK")
</pallas_src>

<mosaic_0001>
module attributes {stable_mosaic.version = 11 : i64} {
  func.func @_lka_kernel(%arg0: i32, %arg1: memref<32x128xf32, #tpu.memory_space<vmem>>, %arg2: memref<160x32xf32, #tpu.memory_space<vmem>>, %arg3: memref<5x128x128xf32, #tpu.memory_space<vmem>>, %arg4: memref<1x128xf32, #tpu.memory_space<vmem>>, %arg5: memref<224x32xf32, #tpu.memory_space<vmem>>, %arg6: memref<7x128x128xf32, #tpu.memory_space<vmem>>, %arg7: memref<1x128xf32, #tpu.memory_space<vmem>>, %arg8: memref<32x128xf32, #tpu.memory_space<vmem>>) attributes {dimension_semantics = [#tpu.dimension_semantics<parallel>], iteration_bounds = array<i64: 1>, scalar_prefetch = 0 : i64, scratch_operands = 0 : i64, tpu.core_type = #tpu.core_type<tc>, window_params = [{transform_indices = @transform_0, window_bounds = array<i64: 32, 128>}, {pipeline_mode = #tpu.pipeline_mode<synchronous>, transform_indices = @transform_1, window_bounds = array<i64: 160, 32>}, {pipeline_mode = #tpu.pipeline_mode<synchronous>, transform_indices = @transform_2, window_bounds = array<i64: 5, 128, 128>}, {pipeline_mode = #tpu.pipeline_mode<synchronous>, transform_indices = @transform_3, window_bounds = array<i64: 1, 128>}, {pipeline_mode = #tpu.pipeline_mode<synchronous>, transform_indices = @transform_4, window_bounds = array<i64: 224, 32>}, {pipeline_mode = #tpu.pipeline_mode<synchronous>, transform_indices = @transform_5, window_bounds = array<i64: 7, 128, 128>}, {pipeline_mode = #tpu.pipeline_mode<synchronous>, transform_indices = @transform_6, window_bounds = array<i64: 1, 128>}, {transform_indices = @transform_7, window_bounds = array<i64: 32, 128>}]} {
    %c0 = arith.constant 0 : index
    %c0_0 = arith.constant 0 : index
    %0 = vector.load %arg1[%c0, %c0_0] : memref<32x128xf32, #tpu.memory_space<vmem>>, vector<32x128xf32>
    %c0_1 = arith.constant 0 : index
    %c0_2 = arith.constant 0 : index
    %1 = vector.load %arg4[%c0_1, %c0_2] : memref<1x128xf32, #tpu.memory_space<vmem>>, vector<1x128xf32>
    %c0_3 = arith.constant 0 : index
    %c0_4 = arith.constant 0 : index
    %2 = vector.load %arg2[%c0_3, %c0_4] : memref<160x32xf32, #tpu.memory_space<vmem>>, vector<160x32xf32>
    %cst = arith.constant dense<0.000000e+00> : vector<160x128xf32>
    %3 = tpu.matmul %2, %0, %cst {dimension_numbers = #tpu.dot_dimension_numbers<[1], [0], [0], [1], [0, 0, 1, 1], [], []>} : vector<160x32xf32>, vector<32x128xf32>, vector<160x128xf32> -> vector<160x128xf32>
    %4 = vector.extract_strided_slice %3 {offsets = [0, 0], sizes = [32, 128], strides = [1, 1]} : vector<160x128xf32> to vector<32x128xf32>
    %c0_5 = arith.constant 0 : index
    %c0_6 = arith.constant 0 : index
    %c0_7 = arith.constant 0 : index
    %5 = vector.load %arg3[%c0_5, %c0_6, %c0_7] : memref<5x128x128xf32, #tpu.memory_space<vmem>>, vector<1x128x128xf32>
    %6 = vector.shape_cast %5 : vector<1x128x128xf32> to vector<128x128xf32>
    %cst_8 = arith.constant dense<0.000000e+00> : vector<32x128xf32>
    %7 = tpu.matmul %4, %6, %cst_8 {dimension_numbers = #tpu.dot_dimension_numbers<[1], [0], [0], [1], [0, 0, 1, 1], [], []>} : vector<32x128xf32>, vector<128x128xf32>, vector<32x128xf32> -> vector<32x128xf32>
    %8 = vector.extract_strided_slice %3 {offsets = [32, 0], sizes = [32, 128], strides = [1, 1]} : vector<160x128xf32> to vector<32x128xf32>
    %c1 = arith.constant 1 : index
    %c0_9 = arith.constant 0 : index
    %c0_10 = arith.constant 0 : index
    %9 = vector.load %arg3[%c1, %c0_9, %c0_10] : memref<5x128x128xf32, #tpu.memory_space<vmem>>, vector<1x128x128xf32>
    %10 = vector.shape_cast %9 : vector<1x128x128xf32> to vector<128x128xf32>
    %cst_11 = arith.constant dense<0.000000e+00> : vector<32x128xf32>
    %11 = tpu.matmul %8, %10, %cst_11 {dimension_numbers = #tpu.dot_dimension_numbers<[1], [0], [0], [1], [0, 0, 1, 1], [], []>} : vector<32x128xf32>, vector<128x128xf32>, vector<32x128xf32> -> vector<32x128xf32>
    %12 = vector.extract_strided_slice %3 {offsets = [64, 0], sizes = [32, 128], strides = [1, 1]} : vector<160x128xf32> to vector<32x128xf32>
    %c2 = arith.constant 2 : index
    %c0_12 = arith.constant 0 : index
    %c0_13 = arith.constant 0 : index
    %13 = vector.load %arg3[%c2, %c0_12, %c0_13] : memref<5x128x128xf32, #tpu.memory_space<vmem>>, vector<1x128x128xf32>
    %14 = vector.shape_cast %13 : vector<1x128x128xf32> to vector<128x128xf32>
    %cst_14 = arith.constant dense<0.000000e+00> : vector<32x128xf32>
    %15 = tpu.matmul %12, %14, %cst_14 {dimension_numbers = #tpu.dot_dimension_numbers<[1], [0], [0], [1], [0, 0, 1, 1], [], []>} : vector<32x128xf32>, vector<128x128xf32>, vector<32x128xf32> -> vector<32x128xf32>
    %16 = vector.extract_strided_slice %3 {offsets = [96, 0], sizes = [32, 128], strides = [1, 1]} : vector<160x128xf32> to vector<32x128xf32>
    %c3 = arith.constant 3 : index
    %c0_15 = arith.constant 0 : index
    %c0_16 = arith.constant 0 : index
    %17 = vector.load %arg3[%c3, %c0_15, %c0_16] : memref<5x128x128xf32, #tpu.memory_space<vmem>>, vector<1x128x128xf32>
    %18 = vector.shape_cast %17 : vector<1x128x128xf32> to vector<128x128xf32>
    %cst_17 = arith.constant dense<0.000000e+00> : vector<32x128xf32>
    %19 = tpu.matmul %16, %18, %cst_17 {dimension_numbers = #tpu.dot_dimension_numbers<[1], [0], [0], [1], [0, 0, 1, 1], [], []>} : vector<32x128xf32>, vector<128x128xf32>, vector<32x128xf32> -> vector<32x128xf32>
    %20 = vector.extract_strided_slice %3 {offsets = [128, 0], sizes = [32, 128], strides = [1, 1]} : vector<160x128xf32> to vector<32x128xf32>
    %c4 = arith.constant 4 : index
    %c0_18 = arith.constant 0 : index
    %c0_19 = arith.constant 0 : index
    %21 = vector.load %arg3[%c4, %c0_18, %c0_19] : memref<5x128x128xf32, #tpu.memory_space<vmem>>, vector<1x128x128xf32>
    %22 = vector.shape_cast %21 : vector<1x128x128xf32> to vector<128x128xf32>
    %cst_20 = arith.constant dense<0.000000e+00> : vector<32x128xf32>
    %23 = tpu.matmul %20, %22, %cst_20 {dimension_numbers = #tpu.dot_dimension_numbers<[1], [0], [0], [1], [0, 0, 1, 1], [], []>} : vector<32x128xf32>, vector<128x128xf32>, vector<32x128xf32> -> vector<32x128xf32>
    %24 = arith.addf %7, %11 : vector<32x128xf32>
    %25 = arith.addf %15, %19 : vector<32x128xf32>
    %26 = arith.addf %24, %25 : vector<32x128xf32>
    %27 = arith.addf %26, %23 : vector<32x128xf32>
    %28 = vector.broadcast %1 : vector<1x128xf32> to vector<32x128xf32>
    %29 = arith.addf %28, %27 : vector<32x128xf32>
    %c0_21 = arith.constant 0 : index
    %c0_22 = arith.constant 0 : index
    %30 = vector.load %arg7[%c0_21, %c0_22] : memref<1x128xf32, #tpu.memory_space<vmem>>, vector<1x128xf32>
    %c0_23 = arith.constant 0 : index
    %c0_24 = arith.constant 0 : index
    %31 = vector.load %arg5[%c0_23, %c0_24] : memref<224x32xf32, #tpu.memory_space<vmem>>, vector<224x32xf32>
    %cst_25 = arith.constant dense<0.000000e+00> : vector<224x128xf32>
    %32 = tpu.matmul %31, %29, %cst_25 {dimension_numbers = #tpu.dot_dimension_numbers<[1], [0], [0], [1], [0, 0, 1, 1], [], []>} : vector<224x32xf32>, vector<32x128xf32>, vector<224x128xf32> -> vector<224x128xf32>
    %33 = vector.extract_strided_slice %32 {offsets = [0, 0], sizes = [32, 128], strides = [1, 1]} : vector<224x128xf32> to vector<32x128xf32>
    %c0_26 = arith.constant 0 : index
    %c0_27 = arith.constant 0 : index
    %c0_28 = arith.constant 0 : index
    %34 = vector.load %arg6[%c0_26, %c0_27, %c0_28] : memref<7x128x128xf32, #tpu.memory_space<vmem>>, vector<1x128x128xf32>
    %35 = vector.shape_cast %34 : vector<1x128x128xf32> to vector<128x128xf32>
    %cst_29 = arith.constant dense<0.000000e+00> : vector<32x128xf32>
    %36 = tpu.matmul %33, %35, %cst_29 {dimension_numbers = #tpu.dot_dimension_numbers<[1], [0], [0], [1], [0, 0, 1, 1], [], []>} : vector<32x128xf32>, vector<128x128xf32>, vector<32x128xf32> -> vector<32x128xf32>
    %37 = vector.extract_strided_slice %32 {offsets = [32, 0], sizes = [32, 128], strides = [1, 1]} : vector<224x128xf32> to vector<32x128xf32>
    %c1_30 = arith.constant 1 : index
    %c0_31 = arith.constant 0 : index
    %c0_32 = arith.constant 0 : index
    %38 = vector.load %arg6[%c1_30, %c0_31, %c0_32] : memref<7x128x128xf32, #tpu.memory_space<vmem>>, vector<1x128x128xf32>
    %39 = vector.shape_cast %38 : vector<1x128x128xf32> to vector<128x128xf32>
    %cst_33 = arith.constant dense<0.000000e+00> : vector<32x128xf32>
    %40 = tpu.matmul %37, %39, %cst_33 {dimension_numbers = #tpu.dot_dimension_numbers<[1], [0], [0], [1], [0, 0, 1, 1], [], []>} : vector<32x128xf32>, vector<128x128xf32>, vector<32x128xf32> -> vector<32x128xf32>
    %41 = vector.extract_strided_slice %32 {offsets = [64, 0], sizes = [32, 128], strides = [1, 1]} : vector<224x128xf32> to vector<32x128xf32>
    %c2_34 = arith.constant 2 : index
    %c0_35 = arith.constant 0 : index
    %c0_36 = arith.constant 0 : index
    %42 = vector.load %arg6[%c2_34, %c0_35, %c0_36] : memref<7x128x128xf32, #tpu.memory_space<vmem>>, vector<1x128x128xf32>
    %43 = vector.shape_cast %42 : vector<1x128x128xf32> to vector<128x128xf32>
    %cst_37 = arith.constant dense<0.000000e+00> : vector<32x128xf32>
    %44 = tpu.matmul %41, %43, %cst_37 {dimension_numbers = #tpu.dot_dimension_numbers<[1], [0], [0], [1], [0, 0, 1, 1], [], []>} : vector<32x128xf32>, vector<128x128xf32>, vector<32x128xf32> -> vector<32x128xf32>
    %45 = vector.extract_strided_slice %32 {offsets = [96, 0], sizes = [32, 128], strides = [1, 1]} : vector<224x128xf32> to vector<32x128xf32>
    %c3_38 = arith.constant 3 : index
    %c0_39 = arith.constant 0 : index
    %c0_40 = arith.constant 0 : index
    %46 = vector.load %arg6[%c3_38, %c0_39, %c0_40] : memref<7x128x128xf32, #tpu.memory_space<vmem>>, vector<1x128x128xf32>
    %47 = vector.shape_cast %46 : vector<1x128x128xf32> to vector<128x128xf32>
    %cst_41 = arith.constant dense<0.000000e+00> : vector<32x128xf32>
    %48 = tpu.matmul %45, %47, %cst_41 {dimension_numbers = #tpu.dot_dimension_numbers<[1], [0], [0], [1], [0, 0, 1, 1], [], []>} : vector<32x128xf32>, vector<128x128xf32>, vector<32x128xf32> -> vector<32x128xf32>
    %49 = vector.extract_strided_slice %32 {offsets = [128, 0], sizes = [32, 128], strides = [1, 1]} : vector<224x128xf32> to vector<32x128xf32>
    %c4_42 = arith.constant 4 : index
    %c0_43 = arith.constant 0 : index
    %c0_44 = arith.constant 0 : index
    %50 = vector.load %arg6[%c4_42, %c0_43, %c0_44] : memref<7x128x128xf32, #tpu.memory_space<vmem>>, vector<1x128x128xf32>
    %51 = vector.shape_cast %50 : vector<1x128x128xf32> to vector<128x128xf32>
    %cst_45 = arith.constant dense<0.000000e+00> : vector<32x128xf32>
    %52 = tpu.matmul %49, %51, %cst_45 {dimension_numbers = #tpu.dot_dimension_numbers<[1], [0], [0], [1], [0, 0, 1, 1], [], []>} : vector<32x128xf32>, vector<128x128xf32>, vector<32x128xf32> -> vector<32x128xf32>
    %53 = vector.extract_strided_slice %32 {offsets = [160, 0], sizes = [32, 128], strides = [1, 1]} : vector<224x128xf32> to vector<32x128xf32>
    %c5 = arith.constant 5 : index
    %c0_46 = arith.constant 0 : index
    %c0_47 = arith.constant 0 : index
    %54 = vector.load %arg6[%c5, %c0_46, %c0_47] : memref<7x128x128xf32, #tpu.memory_space<vmem>>, vector<1x128x128xf32>
    %55 = vector.shape_cast %54 : vector<1x128x128xf32> to vector<128x128xf32>
    %cst_48 = arith.constant dense<0.000000e+00> : vector<32x128xf32>
    %56 = tpu.matmul %53, %55, %cst_48 {dimension_numbers = #tpu.dot_dimension_numbers<[1], [0], [0], [1], [0, 0, 1, 1], [], []>} : vector<32x128xf32>, vector<128x128xf32>, vector<32x128xf32> -> vector<32x128xf32>
    %57 = vector.extract_strided_slice %32 {offsets = [192, 0], sizes = [32, 128], strides = [1, 1]} : vector<224x128xf32> to vector<32x128xf32>
    %c6 = arith.constant 6 : index
    %c0_49 = arith.constant 0 : index
    %c0_50 = arith.constant 0 : index
    %58 = vector.load %arg6[%c6, %c0_49, %c0_50] : memref<7x128x128xf32, #tpu.memory_space<vmem>>, vector<1x128x128xf32>
    %59 = vector.shape_cast %58 : vector<1x128x128xf32> to vector<128x128xf32>
    %cst_51 = arith.constant dense<0.000000e+00> : vector<32x128xf32>
    %60 = tpu.matmul %57, %59, %cst_51 {dimension_numbers = #tpu.dot_dimension_numbers<[1], [0], [0], [1], [0, 0, 1, 1], [], []>} : vector<32x128xf32>, vector<128x128xf32>, vector<32x128xf32> -> vector<32x128xf32>
    %61 = arith.addf %36, %40 : vector<32x128xf32>
    %62 = arith.addf %44, %48 : vector<32x128xf32>
    %63 = arith.addf %52, %56 : vector<32x128xf32>
    %64 = arith.addf %61, %62 : vector<32x128xf32>
    %65 = arith.addf %63, %60 : vector<32x128xf32>
    %66 = arith.addf %64, %65 : vector<32x128xf32>
    %67 = vector.broadcast %30 : vector<1x128xf32> to vector<32x128xf32>
    %68 = arith.addf %67, %66 : vector<32x128xf32>
    %cst_52 = arith.constant 1.000000e+00 : f32
    %69 = vector.broadcast %cst_52 : f32 to vector<32x128xf32>
    %70 = arith.addf %68, %69 : vector<32x128xf32>
    %71 = arith.mulf %0, %70 : vector<32x128xf32>
    %c0_53 = arith.constant 0 : index
    %c0_54 = arith.constant 0 : index
    %72 = vector.load %arg8[%c0_53, %c0_54] : memref<32x128xf32, #tpu.memory_space<vmem>>, vector<32x128xf32>
    tpu.vector_store %arg8[%c0_53, %c0_54], %71 {strides = array<i32>} : memref<32x128xf32, #tpu.memory_space<vmem>>, vector<32x128xf32>,
    return
  }
  func.func @transform_0(%arg0: i32) -> (i32, i32) {
    %c0_i32 = arith.constant 0 : i32
    %c0_i32_0 = arith.constant 0 : i32
    return %arg0, %c0_i32 : i32, i32
  }
  func.func @transform_1(%arg0: i32) -> (i32, i32) {
    %c0_i32 = arith.constant 0 : i32
    %c0_i32_0 = arith.constant 0 : i32
    %c0_i32_1 = arith.constant 0 : i32
    return %c0_i32, %c0_i32_0 : i32, i32
  }
  func.func @transform_2(%arg0: i32) -> (i32, i32, i32) {
    %c0_i32 = arith.constant 0 : i32
    %c0_i32_0 = arith.constant 0 : i32
    %c0_i32_1 = arith.constant 0 : i32
    %c0_i32_2 = arith.constant 0 : i32
    return %c0_i32, %c0_i32_0, %c0_i32_1 : i32, i32, i32
  }
  func.func @transform_3(%arg0: i32) -> (i32, i32) {
    %c0_i32 = arith.constant 0 : i32
    %c0_i32_0 = arith.constant 0 : i32
    %c0_i32_1 = arith.constant 0 : i32
    return %c0_i32, %c0_i32_0 : i32, i32
  }
  func.func @transform_4(%arg0: i32) -> (i32, i32) {
    %c0_i32 = arith.constant 0 : i32
    %c0_i32_0 = arith.constant 0 : i32
    %c0_i32_1 = arith.constant 0 : i32
    return %c0_i32, %c0_i32_0 : i32, i32
  }
  func.func @transform_5(%arg0: i32) -> (i32, i32, i32) {
    %c0_i32 = arith.constant 0 : i32
    %c0_i32_0 = arith.constant 0 : i32
    %c0_i32_1 = arith.constant 0 : i32
    %c0_i32_2 = arith.constant 0 : i32
    return %c0_i32, %c0_i32_0, %c0_i32_1 : i32, i32, i32
  }
  func.func @transform_6(%arg0: i32) -> (i32, i32) {
    %c0_i32 = arith.constant 0 : i32
    %c0_i32_0 = arith.constant 0 : i32
    %c0_i32_1 = arith.constant 0 : i32
    return %c0_i32, %c0_i32_0 : i32, i32
  }
  func.func @transform_7(%arg0: i32) -> (i32, i32) {
    %c0_i32 = arith.constant 0 : i32
    %c0_i32_0 = arith.constant 0 : i32
    return %arg0, %c0_i32 : i32, i32
  }
}

</mosaic_0001>

<llo_original>
// kernel: tpu_custom_call.1
$region0: #{tpu_custom_call.1}
  #allocation0 [shape = 'u32[]', space=smem, size = 0x4, offset = 0x4, fixed_abs, tag = 'smem constant byte address 0x4 - core index']
  #allocation1 [shape = 'u32[144,128]{1,0:T(1,128)}', space=vmem, size = 0x12000, scoped, tag = 'internal scratch']
  %s0 = inlined_call_operand.vmem [shape: f32[32,128], index: 0, kind: input, shape index: {}]
  %s1 = inlined_call_operand.vmem [shape: f32[160,32], index: 1, kind: input, shape index: {}]
  %s2 = inlined_call_operand.hbm [shape: f32[5,128,128], index: 2, kind: input, shape index: {}]
  %s3 = inlined_call_operand.vmem [shape: f32[1,128], index: 3, kind: input, shape index: {}]
  %s4 = inlined_call_operand.vmem [shape: f32[224,32], index: 4, kind: input, shape index: {}]
  %s5 = inlined_call_operand.hbm [shape: f32[7,128,128], index: 5, kind: input, shape index: {}]
  %s6 = inlined_call_operand.vmem [shape: f32[1,128], index: 6, kind: input, shape index: {}]
  %s7 = inlined_call_operand.hbm [shape: f32[32,128], index: 7, kind: output, shape index: {}]
  %s8 = sld [smem:[#allocation0]]
  $region46: #{tpu_custom_call.1} parent=0
    _
  %s10 = ssub.s32 1, %s8
  %s11 = scalar_select 0, %s10, %s8
  $region1: #{tpu_custom_call.1} parent=0
    #allocation2 [shape = 'u8[327680]{0}', space=vmem, size = 0x50000, scoped, tag = 'input window, operand 2, single buffered']
    #allocation3 [shape = 's32[1]{0}', space=sflag, size = 0x4, scoped, tag = 'scoped memory for tpu_custom_call.1']
    #allocation4 [shape = 's32[1]{0}', space=sflag, size = 0x4, scoped, tag = 'scoped memory for tpu_custom_call.1']
    #allocation5 [shape = 'u8[458752]{0}', space=vmem, size = 0x70000, scoped, tag = 'input window, operand 5, single buffered']
    #allocation6 [shape = 's32[1]{0}', space=sflag, size = 0x4, scoped, tag = 'scoped memory for tpu_custom_call.1']
    #allocation7 [shape = 'u8[16384]{0}', space=vmem, size = 0x4000, scoped, tag = 'output window, operand 0, single buffered']
    %12 = vsyncpa [#allocation3], 0
    %13 = vsyncpa [#allocation6], 0
    %14 = vsyncpa [#allocation4], 0
    // Predicated region
    $region2: #{tpu_custom_call.1} parent=1 // pred_check
      _
    $region3: #{tpu_custom_call.1} parent=1 // pred_check_branch
      %16 = sbr.rel (0) target = $region5
    $region4: #{tpu_custom_call.1} parent=1 // pred_region
      _
    $region5: #{tpu_custom_call.1} parent=1 // pred_fallthru
      _
    // Predicated region
    $region6: #{tpu_custom_call.1} parent=1 // pred_check
      _
    $region7: #{tpu_custom_call.1} parent=1 // pred_check_branch
      %18 = sbr.rel (0) target = $region9
    $region8: #{tpu_custom_call.1} parent=1 // pred_region
      _
    $region9: #{tpu_custom_call.1} parent=1 // pred_fallthru
      _
    // Predicated region
    $region10: #{tpu_custom_call.1} parent=1 // pred_check
      _
    $region11: #{tpu_custom_call.1} parent=1 // pred_check_branch
      %20 = sbr.rel (0) target = $region13
    $region12: #{tpu_custom_call.1} parent=1 // pred_region
      %s22 = ssub.s32 10240, 10240
      %23 = vsyncadd [#allocation3], %s22
      %s24 = sshll.u32 [#allocation2], 4
      %s25 = int_to_ptr.vmem [resolvable:$true] %s24
      %30 = dma.hbm_to_vmem [thread:$0]  %s2, 10240, %s25, [#allocation3], 128, 128, 8
    $region13: #{tpu_custom_call.1} parent=1 // pred_fallthru
      _
    // Predicated region
    $region14: #{tpu_custom_call.1} parent=1 // pred_check
      _
    $region15: #{tpu_custom_call.1} parent=1 // pred_check_branch
      %32 = sbr.rel (0) target = $region17
    $region16: #{tpu_custom_call.1} parent=1 // pred_region
      _
    $region17: #{tpu_custom_call.1} parent=1 // pred_fallthru
      _
    // Predicated region
    $region18: #{tpu_custom_call.1} parent=1 // pred_check
      _
    $region19: #{tpu_custom_call.1} parent=1 // pred_check_branch
      %34 = sbr.rel (0) target = $region21
    $region20: #{tpu_custom_call.1} parent=1 // pred_region
      _
    $region21: #{tpu_custom_call.1} parent=1 // pred_fallthru
      _
    // Predicated region
    $region22: #{tpu_custom_call.1} parent=1 // pred_check
      _
    $region23: #{tpu_custom_call.1} parent=1 // pred_check_branch
      %36 = sbr.rel (0) target = $region25
    $region24: #{tpu_custom_call.1} parent=1 // pred_region
      %s38 = ssub.s32 14336, 14336
      %39 = vsyncadd [#allocation6], %s38
      %s40 = sshll.u32 [#allocation5], 4
      %s41 = int_to_ptr.vmem [resolvable:$true] %s40
      %46 = dma.hbm_to_vmem [thread:$0]  %s5, 14336, %s41, [#allocation6], 128, 128, 8
    $region25: #{tpu_custom_call.1} parent=1 // pred_fallthru
      _
    // Predicated region
    $region26: #{tpu_custom_call.1} parent=1 // pred_check
      _
    $region27: #{tpu_custom_call.1} parent=1 // pred_check_branch
      %48 = sbr.rel (0) target = $region29
    $region28: #{tpu_custom_call.1} parent=1 // pred_region
      _
    $region29: #{tpu_custom_call.1} parent=1 // pred_fallthru
      _
    // Predicated region
    $region30: #{tpu_custom_call.1} parent=1 // pred_check
      _
    $region31: #{tpu_custom_call.1} parent=1 // pred_check_branch
      %50 = sbr.rel (0) target = $region33
    $region32: #{tpu_custom_call.1} parent=1 // pred_region
      %51 = dma.done [#allocation3], 10240
    $region33: #{tpu_custom_call.1} parent=1 // pred_fallthru
      _
    // Predicated region
    $region34: #{tpu_custom_call.1} parent=1 // pred_check
      _
    $region35: #{tpu_custom_call.1} parent=1 // pred_check_branch
      %53 = sbr.rel (0) target = $region37
    $region36: #{tpu_custom_call.1} parent=1 // pred_region
      %54 = dma.done [#allocation6], 14336
    $region37: #{tpu_custom_call.1} parent=1 // pred_fallthru
      _
    %v55 = vld [vmem:[%s0] sm:$0xff]
    %v56 = vld [vmem:[%s0 + $0x8] sm:$0xff]
    %v57 = vld [vmem:[%s0 + $0x10] sm:$0xff]
    %v58 = vld [vmem:[%s0 + $0x18] sm:$0xff]
    %v59 = vld [vmem:[%s3] sm:$0x1]
    %v60 = vld [vmem:[%s1] sm:$0xff]
    %v61 = vld [vmem:[%s1 + $0x8] sm:$0xff]
    %v62 = vld [vmem:[%s1 + $0x10] sm:$0xff]
    %v63 = vld [vmem:[%s1 + $0x18] sm:$0xff]
    %v64 = vld [vmem:[%s1 + $0x20] sm:$0xff]
    %v65 = vld [vmem:[%s1 + $0x28] sm:$0xff]
    %v66 = vld [vmem:[%s1 + $0x30] sm:$0xff]
    %v67 = vld [vmem:[%s1 + $0x38] sm:$0xff]
    %v68 = vld [vmem:[%s1 + $0x40] sm:$0xff]
    %v69 = vld [vmem:[%s1 + $0x48] sm:$0xff]
    %v70 = vld [vmem:[%s1 + $0x50] sm:$0xff]
    %v71 = vld [vmem:[%s1 + $0x58] sm:$0xff]
    %v72 = vld [vmem:[%s1 + $0x60] sm:$0xff]
    %v73 = vld [vmem:[%s1 + $0x68] sm:$0xff]
    %v74 = vld [vmem:[%s1 + $0x70] sm:$0xff]
    %v75 = vld [vmem:[%s1 + $0x78] sm:$0xff]
    %v76 = vld [vmem:[%s1 + $0x80] sm:$0xff]
    %v77 = vld [vmem:[%s1 + $0x88] sm:$0xff]
    %v78 = vld [vmem:[%s1 + $0x90] sm:$0xff]
    %v79 = vld [vmem:[%s1 + $0x98] sm:$0xff]
    %vm80 = vcmask 261120
    %v82 = vsel %vm80, %v60, 0
    %v85 = vsel %vm80, %v61, 0
    %v88 = vsel %vm80, %v62, 0
    %v91 = vsel %vm80, %v63, 0
    %v94 = vsel %vm80, %v64, 0
    %v97 = vsel %vm80, %v65, 0
    %v100 = vsel %vm80, %v66, 0
    %v103 = vsel %vm80, %v67, 0
    %v106 = vsel %vm80, %v68, 0
    %v109 = vsel %vm80, %v69, 0
    %v112 = vsel %vm80, %v70, 0
    %v115 = vsel %vm80, %v71, 0
    %v118 = vsel %vm80, %v72, 0
    %v121 = vsel %vm80, %v73, 0
    %v124 = vsel %vm80, %v74, 0
    %v127 = vsel %vm80, %v75, 0
    %v130 = vsel %vm80, %v76, 0
    %v133 = vsel %vm80, %v77, 0
    %v136 = vsel %vm80, %v78, 0
    %v139 = vsel %vm80, %v79, 0
    %141 = vmatprep.subr.mxu0 0.0
    %142 = vmatpush1.msra.mxu0 %v55
    %143 = vmatprep.subr.mxu0 0.0
    %144 = vmatpush1.msra.mxu0 %v56
    %145 = vmatprep.subr.mxu0 0.0
    %146 = vmatpush1.msra.mxu0 %v57
    %147 = vmatprep.subr.mxu0 0.0
    %148 = vmatpush1.msra.mxu0 %v58
    %149 = vmatprep.subr.mxu0 0.0
    %150 = vmatpush1.msra.mxu0 0.0
    %151 = vmatprep.subr.mxu0 0.0
    %152 = vmatpush1.msra.mxu0 0.0
    %153 = vmatprep.subr.mxu0 0.0
    %154 = vmatpush1.msra.mxu0 0.0
    %155 = vmatprep.subr.mxu0 0.0
    %156 = vmatpush1.msra.mxu0 0.0
    %157 = vmatprep.subr.mxu0 0.0
    %158 = vmatpush1.msra.mxu0 0.0
    %159 = vmatprep.subr.mxu0 0.0
    %160 = vmatpush1.msra.mxu0 0.0
    %161 = vmatprep.subr.mxu0 0.0
    %162 = vmatpush1.msra.mxu0 0.0
    %163 = vmatprep.subr.mxu0 0.0
    %164 = vmatpush1.msra.mxu0 0.0
    %165 = vmatprep.subr.mxu0 0.0
    %166 = vmatpush1.msra.mxu0 0.0
    %167 = vmatprep.subr.mxu0 0.0
    %168 = vmatpush1.msra.mxu0 0.0
    %169 = vmatprep.subr.mxu0 0.0
    %170 = vmatpush1.msra.mxu0 0.0
    %171 = vmatprep.subr.mxu0 0.0
    %172 = vmatpush1.msra.mxu0 0.0
    %173 = vmatprep.subr.mxu0 0.0
    %174 = vmatpush1.msra.mxu0 0.0
    %175 = vmatprep.subr.mxu0 0.0
    %176 = vmatpush1.msra.mxu0 0.0
    %177 = vmatprep.subr.mxu0 0.0
    %178 = vmatpush1.msra.mxu0 0.0
    %179 = vmatprep.subr.mxu0 0.0
    %180 = vmatpush1.msra.mxu0 0.0
    %181 = vmatprep.subr.mxu0 0.0
    %182 = vmatpush1.msra.mxu0 0.0
    %183 = vmatprep.subr.mxu0 0.0
    %184 = vmatpush1.msra.mxu0 0.0
    %185 = vmatprep.subr.mxu0 0.0
    %186 = vmatpush1.msra.mxu0 0.0
    %187 = vmatprep.subr.mxu0 0.0
    %188 = vmatpush1.msra.mxu0 0.0
    %189 = vmatprep.subr.mxu0 0.0
    %190 = vmatpush1.msra.mxu0 0.0
    %191 = vmatprep.subr.mxu0 0.0
    %192 = vmatpush1.msra.mxu0 0.0
    %193 = vmatprep.subr.mxu0 0.0
    %194 = vmatpush1.msra.mxu0 0.0
    %195 = vmatprep.subr.mxu0 0.0
    %196 = vmatpush1.msra.mxu0 0.0
    %197 = vmatprep.subr.mxu0 0.0
    %198 = vmatpush1.msra.mxu0 0.0
    %199 = vmatprep.subr.mxu0 0.0
    %200 = vmatpush1.msra.mxu0 0.0
    %201 = vmatprep.subr.mxu0 0.0
    %202 = vmatpush1.msra.mxu0 0.0
    %203 = vmatprep.subr.mxu0 0.0
    %204 = vmatpush1.msra.mxu0 0.0
    %205 = vmatprep.mubr.f32.mxu0 0.0
    %206 = vmatmul.mubr.f32.gmra.mrb[0].mxu0 %v82
    %v207 = vpop.f32.mrb[0].mxu0
    %v208 = vadd.f32 0.0, %v207
    %v209 = vpop.f32.mrb[0].mxu0
    %210 = vmatprep.mubr.f32.mxu0 0.0
    %211 = vmatmul.mubr.f32.gmra.mrb[0].mxu0 %v85
    %v212 = vpop.f32.mrb[0].mxu0
    %v213 = vadd.f32 0.0, %v212
    %v214 = vpop.f32.mrb[0].mxu0
    %215 = vmatprep.mubr.f32.mxu0 0.0
    %216 = vmatmul.mubr.f32.gmra.mrb[0].mxu0 %v88
    %v217 = vpop.f32.mrb[0].mxu0
    %v218 = vadd.f32 0.0, %v217
    %v219 = vpop.f32.mrb[0].mxu0
    %220 = vmatprep.mubr.f32.mxu0 0.0
    %221 = vmatmul.mubr.f32.gmra.mrb[0].mxu0 %v91
    %v222 = vpop.f32.mrb[0].mxu0
    %v223 = vadd.f32 0.0, %v222
    %v224 = vpop.f32.mrb[0].mxu0
    %225 = vmatprep.mubr.f32.mxu0 0.0
    %226 = vmatmul.mubr.f32.gmra.mrb[0].mxu0 %v94
    %v227 = vpop.f32.mrb[0].mxu0
    %v228 = vadd.f32 0.0, %v227
    %v229 = vpop.f32.mrb[0].mxu0
    %230 = vmatprep.mubr.f32.mxu0 0.0
    %231 = vmatmul.mubr.f32.gmra.mrb[0].mxu0 %v97
    %v232 = vpop.f32.mrb[0].mxu0
    %v233 = vadd.f32 0.0, %v232
    %v234 = vpop.f32.mrb[0].mxu0
    %235 = vmatprep.mubr.f32.mxu0 0.0
    %236 = vmatmul.mubr.f32.gmra.mrb[0].mxu0 %v100
    %v237 = vpop.f32.mrb[0].mxu0
    %v238 = vadd.f32 0.0, %v237
    %v239 = vpop.f32.mrb[0].mxu0
    %240 = vmatprep.mubr.f32.mxu0 0.0
    %241 = vmatmul.mubr.f32.gmra.mrb[0].mxu0 %v103
    %v242 = vpop.f32.mrb[0].mxu0
    %v243 = vadd.f32 0.0, %v242
    %v244 = vpop.f32.mrb[0].mxu0
    %245 = vmatprep.mubr.f32.mxu0 0.0
    %246 = vmatmul.mubr.f32.gmra.mrb[0].mxu0 %v106
    %v247 = vpop.f32.mrb[0].mxu0
    %v248 = vadd.f32 0.0, %v247
    %v249 = vpop.f32.mrb[0].mxu0
    %250 = vmatprep.mubr.f32.mxu0 0.0
    %251 = vmatmul.mubr.f32.gmra.mrb[0].mxu0 %v109
    %v252 = vpop.f32.mrb[0].mxu0
    %v253 = vadd.f32 0.0, %v252
    %v254 = vpop.f32.mrb[0].mxu0
    %255 = vmatprep.mubr.f32.mxu0 0.0
    %256 = vmatmul.mubr.f32.gmra.mrb[0].mxu0 %v112
    %v257 = vpop.f32.mrb[0].mxu0
    %v258 = vadd.f32 0.0, %v257
    %v259 = vpop.f32.mrb[0].mxu0
    %260 = vmatprep.mubr.f32.mxu0 0.0
    %261 = vmatmul.mubr.f32.gmra.mrb[0].mxu0 %v115
    %v262 = vpop.f32.mrb[0].mxu0
    %v263 = vadd.f32 0.0, %v262
    %v264 = vpop.f32.mrb[0].mxu0
    %265 = vmatprep.mubr.f32.mxu0 0.0
    %266 = vmatmul.mubr.f32.gmra.mrb[0].mxu0 %v118
    %v267 = vpop.f32.mrb[0].mxu0
    %v268 = vadd.f32 0.0, %v267
    %v269 = vpop.f32.mrb[0].mxu0
    %270 = vmatprep.mubr.f32.mxu0 0.0
    %271 = vmatmul.mubr.f32.gmra.mrb[0].mxu0 %v121
    %v272 = vpop.f32.mrb[0].mxu0
    %v273 = vadd.f32 0.0, %v272
    %v274 = vpop.f32.mrb[0].mxu0
    %275 = vmatprep.mubr.f32.mxu0 0.0
    %276 = vmatmul.mubr.f32.gmra.mrb[0].mxu0 %v124
    %v277 = vpop.f32.mrb[0].mxu0
    %v278 = vadd.f32 0.0, %v277
    %v279 = vpop.f32.mrb[0].mxu0
    %280 = vmatprep.mubr.f32.mxu0 0.0
    %281 = vmatmul.mubr.f32.gmra.mrb[0].mxu0 %v127
    %v282 = vpop.f32.mrb[0].mxu0
    %v283 = vadd.f32 0.0, %v282
    %v284 = vpop.f32.mrb[0].mxu0
    %285 = vmatprep.mubr.f32.mxu0 0.0
    %286 = vmatmul.mubr.f32.gmra.mrb[0].mxu0 %v130
    %v287 = vpop.f32.mrb[0].mxu0
    %v288 = vadd.f32 0.0, %v287
    %v289 = vpop.f32.mrb[0].mxu0
    %290 = vmatprep.mubr.f32.mxu0 0.0
    %291 = vmatmul.mubr.f32.gmra.mrb[0].mxu0 %v133
    %v292 = vpop.f32.mrb[0].mxu0
    %v293 = vadd.f32 0.0, %v292
    %v294 = vpop.f32.mrb[0].mxu0
    %295 = vmatprep.mubr.f32.mxu0 0.0
    %296 = vmatmul.mubr.f32.gmra.mrb[0].mxu0 %v136
    %v297 = vpop.f32.mrb[0].mxu0
    %v298 = vadd.f32 0.0, %v297
    %v299 = vpop.f32.mrb[0].mxu0
    %300 = vmatprep.mubr.f32.mxu0 0.0
    %301 = vmatmul.mubr.f32.gmra.mrb[0].mxu0 %v139
    %v302 = vpop.f32.mrb[0].mxu0
    %v303 = vadd.f32 0.0, %v302
    %v304 = vpop.f32.mrb[0].mxu0
    %305 = vdwg.mxu0
    %v306 = vld [vmem:[#allocation2] sm:$0xff]
    %v307 = vld [vmem:[#allocation2 + $0x8] sm:$0xff]
    %v308 = vld [vmem:[#allocation2 + $0x10] sm:$0xff]
    %v309 = vld [vmem:[#allocation2 + $0x18] sm:$0xff]
    %v310 = vld [vmem:[#allocation2 + $0x20] sm:$0xff]
    %v311 = vld [vmem:[#allocation2 + $0x28] sm:$0xff]
    %v312 = vld [vmem:[#allocation2 + $0x30] sm:$0xff]
    %v313 = vld [vmem:[#allocation2 + $0x38] sm:$0xff]
    %v314 = vld [vmem:[#allocation2 + $0x40] sm:$0xff]
    %v315 = vld [vmem:[#allocation2 + $0x48] sm:$0xff]
    %v316 = vld [vmem:[#allocation2 + $0x50] sm:$0xff]
    %v317 = vld [vmem:[#allocation2 + $0x58] sm:$0xff]
    %v318 = vld [vmem:[#allocation2 + $0x60] sm:$0xff]
    %v319 = vld [vmem:[#allocation2 + $0x68] sm:$0xff]
    %v320 = vld [vmem:[#allocation2 + $0x70] sm:$0xff]
    %v321 = vld [vmem:[#allocation2 + $0x78] sm:$0xff]
    %s322 = scalar_lea.vmem [#allocation2], 128
    %v323 = vld [vmem:[%s322] sm:$0xff]
    %v324 = vld [vmem:[%s322 + $0x8] sm:$0xff]
    %v325 = vld [vmem:[%s322 + $0x10] sm:$0xff]
    %v326 = vld [vmem:[%s322 + $0x18] sm:$0xff]
    %v327 = vld [vmem:[%s322 + $0x20] sm:$0xff]
    %v328 = vld [vmem:[%s322 + $0x28] sm:$0xff]
    %v329 = vld [vmem:[%s322 + $0x30] sm:$0xff]
    %v330 = vld [vmem:[%s322 + $0x38] sm:$0xff]
    %v331 = vld [vmem:[%s322 + $0x40] sm:$0xff]
    %v332 = vld [vmem:[%s322 + $0x48] sm:$0xff]
    %v333 = vld [vmem:[%s322 + $0x50] sm:$0xff]
    %v334 = vld [vmem:[%s322 + $0x58] sm:$0xff]
    %v335 = vld [vmem:[%s322 + $0x60] sm:$0xff]
    %v336 = vld [vmem:[%s322 + $0x68] sm:$0xff]
    %v337 = vld [vmem:[%s322 + $0x70] sm:$0xff]
    %v338 = vld [vmem:[%s322 + $0x78] sm:$0xff]
    %339 = vmatprep.subr.mxu0 0.0
    %340 = vmatpush1.msra.mxu0 %v323
    %341 = vmatprep.subr.mxu0 0.0
    %342 = vmatpush1.msra.mxu0 %v324
    %343 = vmatprep.subr.mxu0 0.0
    %344 = vmatpush1.msra.mxu0 %v325
    %345 = vmatprep.subr.mxu0 0.0
    %346 = vmatpush1.msra.mxu0 %v326
    %347 = vmatprep.subr.mxu0 0.0
    %348 = vmatpush1.msra.mxu0 %v327
    %349 = vmatprep.subr.mxu0 0.0
    %350 = vmatpush1.msra.mxu0 %v328
    %351 = vmatprep.subr.mxu0 0.0
    %352 = vmatpush1.msra.mxu0 %v329
    %353 = vmatprep.subr.mxu0 0.0
    %354 = vmatpush1.msra.mxu0 %v330
    %355 = vmatprep.subr.mxu0 0.0
    %356 = vmatpush1.msra.mxu0 %v331
    %357 = vmatprep.subr.mxu0 0.0
    %358 = vmatpush1.msra.mxu0 %v332
    %359 = vmatprep.subr.mxu0 0.0
    %360 = vmatpush1.msra.mxu0 %v333
    %361 = vmatprep.subr.mxu0 0.0
    %362 = vmatpush1.msra.mxu0 %v334
    %363 = vmatprep.subr.mxu0 0.0
    %364 = vmatpush1.msra.mxu0 %v335
    %365 = vmatprep.subr.mxu0 0.0
    %366 = vmatpush1.msra.mxu0 %v336
    %367 = vmatprep.subr.mxu0 0.0
    %368 = vmatpush1.msra.mxu0 %v337
    %369 = vmatprep.subr.mxu0 0.0
    %370 = vmatpush1.msra.mxu0 %v338
    %371 = vmatprep.subr.mxu0 0.0
    %372 = vmatpush1.msra.mxu0 0.0
    %373 = vmatprep.subr.mxu0 0.0
    %374 = vmatpush1.msra.mxu0 0.0
    %375 = vmatprep.subr.mxu0 0.0
    %376 = vmatpush1.msra.mxu0 0.0
    %377 = vmatprep.subr.mxu0 0.0
    %378 = vmatpush1.msra.mxu0 0.0
    %379 = vmatprep.subr.mxu0 0.0
    %380 = vmatpush1.msra.mxu0 0.0
    %381 = vmatprep.subr.mxu0 0.0
    %382 = vmatpush1.msra.mxu0 0.0
    %383 = vmatprep.subr.mxu0 0.0
    %384 = vmatpush1.msra.mxu0 0.0
    %385 = vmatprep.subr.mxu0 0.0
    %386 = vmatpush1.msra.mxu0 0.0
    %387 = vmatprep.subr.mxu0 0.0
    %388 = vmatpush1.msra.mxu0 0.0
    %389 = vmatprep.subr.mxu0 0.0
    %390 = vmatpush1.msra.mxu0 0.0
    %391 = vmatprep.subr.mxu0 0.0
    %392 = vmatpush1.msra.mxu0 0.0
    %393 = vmatprep.subr.mxu0 0.0
    %394 = vmatpush1.msra.mxu0 0.0
    %395 = vmatprep.subr.mxu0 0.0
    %396 = vmatpush1.msra.mxu0 0.0
    %397 = vmatprep.subr.mxu0 0.0
    %398 = vmatpush1.msra.mxu0 0.0
    %399 = vmatprep.subr.mxu0 0.0
    %400 = vmatpush1.msra.mxu0 0.0
    %401 = vmatprep.subr.mxu0 0.0
    %402 = vmatpush1.msra.mxu0 0.0
    %403 = vmatprep.mubr.f32.mxu0 0.0
    %404 = vmatmul.mubr.f32.gmra.mrb[0].mxu0 %v228
    %v405 = vpop.f32.mrb[0].mxu0
    %v406 = vadd.f32 0.0, %v405
    %v407 = vpop.f32.mrb[0].mxu0
    %408 = vmatprep.mubr.f32.mxu0 0.0
    %409 = vmatmul.mubr.f32.gmra.mrb[0].mxu0 %v233
    %v410 = vpop.f32.mrb[0].mxu0
    %v411 = vadd.f32 0.0, %v410
    %v412 = vpop.f32.mrb[0].mxu0
    %413 = vmatprep.mubr.f32.mxu0 0.0
    %414 = vmatmul.mubr.f32.gmra.mrb[0].mxu0 %v238
    %v415 = vpop.f32.mrb[0].mxu0
    %v416 = vadd.f32 0.0, %v415
    %v417 = vpop.f32.mrb[0].mxu0
    %418 = vmatprep.mubr.f32.mxu0 0.0
    %419 = vmatmul.mubr.f32.gmra.mrb[0].mxu0 %v243
    %v420 = vpop.f32.mrb[0].mxu0
    %v421 = vadd.f32 0.0, %v420
    %v422 = vpop.f32.mrb[0].mxu0
    %423 = vdwg.mxu0
    %s424 = scalar_lea.vmem [#allocation2], 256
    %v425 = vld [vmem:[%s424] sm:$0xff]
    %v426 = vld [vmem:[%s424 + $0x8] sm:$0xff]
    %v427 = vld [vmem:[%s424 + $0x10] sm:$0xff]
    %v428 = vld [vmem:[%s424 + $0x18] sm:$0xff]
    %v429 = vld [vmem:[%s424 + $0x20] sm:$0xff]
    %v430 = vld [vmem:[%s424 + $0x28] sm:$0xff]
    %v431 = vld [vmem:[%s424 + $0x30] sm:$0xff]
    %v432 = vld [vmem:[%s424 + $0x38] sm:$0xff]
    %v433 = vld [vmem:[%s424 + $0x40] sm:$0xff]
    %v434 = vld [vmem:[%s424 + $0x48] sm:$0xff]
    %v435 = vld [vmem:[%s424 + $0x50] sm:$0xff]
    %v436 = vld [vmem:[%s424 + $0x58] sm:$0xff]
    %v437 = vld [vmem:[%s424 + $0x60] sm:$0xff]
    %v438 = vld [vmem:[%s424 + $0x68] sm:$0xff]
    %v439 = vld [vmem:[%s424 + $0x70] sm:$0xff]
    %v440 = vld [vmem:[%s424 + $0x78] sm:$0xff]
    %s441 = scalar_lea.vmem [#allocation2], 384
    %v442 = vld [vmem:[%s441] sm:$0xff]
    %v443 = vld [vmem:[%s441 + $0x8] sm:$0xff]
    %v444 = vld [vmem:[%s441 + $0x10] sm:$0xff]
    %v445 = vld [vmem:[%s441 + $0x18] sm:$0xff]
    %v446 = vld [vmem:[%s441 + $0x20] sm:$0xff]
    %v447 = vld [vmem:[%s441 + $0x28] sm:$0xff]
    %v448 = vld [vmem:[%s441 + $0x30] sm:$0xff]
    %v449 = vld [vmem:[%s441 + $0x38] sm:$0xff]
    %v450 = vld [vmem:[%s441 + $0x40] sm:$0xff]
    %v451 = vld [vmem:[%s441 + $0x48] sm:$0xff]
    %v452 = vld [vmem:[%s441 + $0x50] sm:$0xff]
    %v453 = vld [vmem:[%s441 + $0x58] sm:$0xff]
    %v454 = vld [vmem:[%s441 + $0x60] sm:$0xff]
    %v455 = vld [vmem:[%s441 + $0x68] sm:$0xff]
    %v456 = vld [vmem:[%s441 + $0x70] sm:$0xff]
    %v457 = vld [vmem:[%s441 + $0x78] sm:$0xff]
    %458 = vmatprep.subr.mxu0 0.0
    %459 = vmatpush1.msra.mxu0 %v442
    %460 = vmatprep.subr.mxu0 0.0
    %461 = vmatpush1.msra.mxu0 %v443
    %462 = vmatprep.subr.mxu0 0.0
    %463 = vmatpush1.msra.mxu0 %v444
    %464 = vmatprep.subr.mxu0 0.0
    %465 = vmatpush1.msra.mxu0 %v445
    %466 = vmatprep.subr.mxu0 0.0
    %467 = vmatpush1.msra.mxu0 %v446
    %468 = vmatprep.subr.mxu0 0.0
    %469 = vmatpush1.msra.mxu0 %v447
    %470 = vmatprep.subr.mxu0 0.0
    %471 = vmatpush1.msra.mxu0 %v448
    %472 = vmatprep.subr.mxu0 0.0
    %473 = vmatpush1.msra.mxu0 %v449
    %474 = vmatprep.subr.mxu0 0.0
    %475 = vmatpush1.msra.mxu0 %v450
    %476 = vmatprep.subr.mxu0 0.0
    %477 = vmatpush1.msra.mxu0 %v451
    %478 = vmatprep.subr.mxu0 0.0
    %479 = vmatpush1.msra.mxu0 %v452
    %480 = vmatprep.subr.mxu0 0.0
    %481 = vmatpush1.msra.mxu0 %v453
    %482 = vmatprep.subr.mxu0 0.0
    %483 = vmatpush1.msra.mxu0 %v454
    %484 = vmatprep.subr.mxu0 0.0
    %485 = vmatpush1.msra.mxu0 %v455
    %486 = vmatprep.subr.mxu0 0.0
    %487 = vmatpush1.msra.mxu0 %v456
    %488 = vmatprep.subr.mxu0 0.0
    %489 = vmatpush1.msra.mxu0 %v457
    %490 = vmatprep.subr.mxu0 0.0
    %491 = vmatpush1.msra.mxu0 0.0
    %492 = vmatprep.subr.mxu0 0.0
    %493 = vmatpush1.msra.mxu0 0.0
    %494 = vmatprep.subr.mxu0 0.0
    %495 = vmatpush1.msra.mxu0 0.0
    %496 = vmatprep.subr.mxu0 0.0
    %497 = vmatpush1.msra.mxu0 0.0
    %498 = vmatprep.subr.mxu0 0.0
    %499 = vmatpush1.msra.mxu0 0.0
    %500 = vmatprep.subr.mxu0 0.0
    %501 = vmatpush1.msra.mxu0 0.0
    %502 = vmatprep.subr.mxu0 0.0
    %503 = vmatpush1.msra.mxu0 0.0
    %504 = vmatprep.subr.mxu0 0.0
    %505 = vmatpush1.msra.mxu0 0.0
    %506 = vmatprep.subr.mxu0 0.0
    %507 = vmatpush1.msra.mxu0 0.0
    %508 = vmatprep.subr.mxu0 0.0
    %509 = vmatpush1.msra.mxu0 0.0
    %510 = vmatprep.subr.mxu0 0.0
    %511 = vmatpush1.msra.mxu0 0.0
    %512 = vmatprep.subr.mxu0 0.0
    %513 = vmatpush1.msra.mxu0 0.0
    %514 = vmatprep.subr.mxu0 0.0
    %515 = vmatpush1.msra.mxu0 0.0
    %516 = vmatprep.subr.mxu0 0.0
    %517 = vmatpush1.msra.mxu0 0.0
    %518 = vmatprep.subr.mxu0 0.0
    %519 = vmatpush1.msra.mxu0 0.0
    %520 = vmatprep.subr.mxu0 0.0
    %521 = vmatpush1.msra.mxu0 0.0
    %522 = vmatprep.mubr.f32.mxu0 0.0
    %523 = vmatmul.mubr.f32.gmra.mrb[0].mxu0 %v268
    %v524 = vpop.f32.mrb[0].mxu0
    %v525 = vadd.f32 0.0, %v524
    %v526 = vpop.f32.mrb[0].mxu0
    %527 = vmatprep.mubr.f32.mxu0 0.0
    %528 = vmatmul.mubr.f32.gmra.mrb[0].mxu0 %v273
    %v529 = vpop.f32.mrb[0].mxu0
    %v530 = vadd.f32 0.0, %v529
    %v531 = vpop.f32.mrb[0].mxu0
    %532 = vmatprep.mubr.f32.mxu0 0.0
    %533 = vmatmul.mubr.f32.gmra.mrb[0].mxu0 %v278
    %v534 = vpop.f32.mrb[0].mxu0
    %v535 = vadd.f32 0.0, %v534
    %v536 = vpop.f32.mrb[0].mxu0
    %537 = vmatprep.mubr.f32.mxu0 0.0
    %538 = vmatmul.mubr.f32.gmra.mrb[0].mxu0 %v283
    %v539 = vpop.f32.mrb[0].mxu0
    %v540 = vadd.f32 0.0, %v539
    %v541 = vpop.f32.mrb[0].mxu0
    %542 = vdwg.mxu0
    %s543 = scalar_lea.vmem [#allocation2], 512
    %v544 = vld [vmem:[%s543] sm:$0xff]
    %v545 = vld [vmem:[%s543 + $0x8] sm:$0xff]
    %v546 = vld [vmem:[%s543 + $0x10] sm:$0xff]
    %v547 = vld [vmem:[%s543 + $0x18] sm:$0xff]
    %v548 = vld [vmem:[%s543 + $0x20] sm:$0xff]
    %v549 = vld [vmem:[%s543 + $0x28] sm:$0xff]
    %v550 = vld [vmem:[%s543 + $0x30] sm:$0xff]
    %v551 = vld [vmem:[%s543 + $0x38] sm:$0xff]
    %v552 = vld [vmem:[%s543 + $0x40] sm:$0xff]
    %v553 = vld [vmem:[%s543 + $0x48] sm:$0xff]
    %v554 = vld [vmem:[%s543 + $0x50] sm:$0xff]
    %v555 = vld [vmem:[%s543 + $0x58] sm:$0xff]
    %v556 = vld [vmem:[%s543 + $0x60] sm:$0xff]
    %v557 = vld [vmem:[%s543 + $0x68] sm:$0xff]
    %v558 = vld [vmem:[%s543 + $0x70] sm:$0xff]
    %v559 = vld [vmem:[%s543 + $0x78] sm:$0xff]
    %560 = vmatprep.subr.mxu0 0.0
    %561 = vmatpush1.msra.mxu0 %v544
    %562 = vmatprep.subr.mxu0 0.0
    %563 = vmatpush1.msra.mxu0 %v545
    %564 = vmatprep.subr.mxu0 0.0
    %565 = vmatpush1.msra.mxu0 %v546
    %566 = vmatprep.subr.mxu0 0.0
    %567 = vmatpush1.msra.mxu0 %v547
    %568 = vmatprep.subr.mxu0 0.0
    %569 = vmatpush1.msra.mxu0 %v548
    %570 = vmatprep.subr.mxu0 0.0
    %571 = vmatpush1.msra.mxu0 %v549
    %572 = vmatprep.subr.mxu0 0.0
    %573 = vmatpush1.msra.mxu0 %v550
    %574 = vmatprep.subr.mxu0 0.0
    %575 = vmatpush1.msra.mxu0 %v551
    %576 = vmatprep.subr.mxu0 0.0
    %577 = vmatpush1.msra.mxu0 %v552
    %578 = vmatprep.subr.mxu0 0.0
    %579 = vmatpush1.msra.mxu0 %v553
    %580 = vmatprep.subr.mxu0 0.0
    %581 = vmatpush1.msra.mxu0 %v554
    %582 = vmatprep.subr.mxu0 0.0
    %583 = vmatpush1.msra.mxu0 %v555
    %584 = vmatprep.subr.mxu0 0.0
    %585 = vmatpush1.msra.mxu0 %v556
    %586 = vmatprep.subr.mxu0 0.0
    %587 = vmatpush1.msra.mxu0 %v557
    %588 = vmatprep.subr.mxu0 0.0
    %589 = vmatpush1.msra.mxu0 %v558
    %590 = vmatprep.subr.mxu0 0.0
    %591 = vmatpush1.msra.mxu0 %v559
    %592 = vmatprep.subr.mxu0 0.0
    %593 = vmatpush1.msra.mxu0 0.0
    %594 = vmatprep.subr.mxu0 0.0
    %595 = vmatpush1.msra.mxu0 0.0
    %596 = vmatprep.subr.mxu0 0.0
    %597 = vmatpush1.msra.mxu0 0.0
    %598 = vmatprep.subr.mxu0 0.0
    %599 = vmatpush1.msra.mxu0 0.0
    %600 = vmatprep.subr.mxu0 0.0
    %601 = vmatpush1.msra.mxu0 0.0
    %602 = vmatprep.subr.mxu0 0.0
    %603 = vmatpush1.msra.mxu0 0.0
    %604 = vmatprep.subr.mxu0 0.0
    %605 = vmatpush1.msra.mxu0 0.0
    %606 = vmatprep.subr.mxu0 0.0
    %607 = vmatpush1.msra.mxu0 0.0
    %608 = vmatprep.subr.mxu0 0.0
    %609 = vmatpush1.msra.mxu0 0.0
    %610 = vmatprep.subr.mxu0 0.0
    %611 = vmatpush1.msra.mxu0 0.0
    %612 = vmatprep.subr.mxu0 0.0
    %613 = vmatpush1.msra.mxu0 0.0
    %614 = vmatprep.subr.mxu0 0.0
    %615 = vmatpush1.msra.mxu0 0.0
    %616 = vmatprep.subr.mxu0 0.0
    %617 = vmatpush1.msra.mxu0 0.0
    %618 = vmatprep.subr.mxu0 0.0
    %619 = vmatpush1.msra.mxu0 0.0
    %620 = vmatprep.subr.mxu0 0.0
    %621 = vmatpush1.msra.mxu0 0.0
    %622 = vmatprep.subr.mxu0 0.0
    %623 = vmatpush1.msra.mxu0 0.0
    %624 = vmatprep.mubr.f32.mxu0 0.0
    %625 = vmatmul.mubr.f32.gmra.mrb[0].mxu0 %v288
    %v626 = vpop.f32.mrb[0].mxu0
    %v627 = vadd.f32 0.0, %v626
    %v628 = vpop.f32.mrb[0].mxu0
    %629 = vmatprep.mubr.f32.mxu0 0.0
    %630 = vmatmul.mubr.f32.gmra.mrb[0].mxu0 %v293
    %v631 = vpop.f32.mrb[0].mxu0
    %v632 = vadd.f32 0.0, %v631
    %v633 = vpop.f32.mrb[0].mxu0
    %634 = vmatprep.mubr.f32.mxu0 0.0
    %635 = vmatmul.mubr.f32.gmra.mrb[0].mxu0 %v298
    %v636 = vpop.f32.mrb[0].mxu0
    %v637 = vadd.f32 0.0, %v636
    %v638 = vpop.f32.mrb[0].mxu0
    %639 = vmatprep.mubr.f32.mxu0 0.0
    %640 = vmatmul.mubr.f32.gmra.mrb[0].mxu0 %v303
    %v641 = vpop.f32.mrb[0].mxu0
    %v642 = vadd.f32 0.0, %v641
    %v643 = vpop.f32.mrb[0].mxu0
    %644 = vdwg.mxu0
    %645 = vmatprep.subr.mxu0 0.0
    %646 = vmatpush1.msra.mxu0 %v306
    %647 = vmatprep.subr.mxu0 0.0
    %648 = vmatpush1.msra.mxu0 %v307
    %649 = vmatprep.subr.mxu0 0.0
    %650 = vmatpush1.msra.mxu0 %v308
    %651 = vmatprep.subr.mxu0 0.0
    %652 = vmatpush1.msra.mxu0 %v309
    %653 = vmatprep.subr.mxu0 0.0
    %654 = vmatpush1.msra.mxu0 %v310
    %655 = vmatprep.subr.mxu0 0.0
    %656 = vmatpush1.msra.mxu0 %v311
    %657 = vmatprep.subr.mxu0 0.0
    %658 = vmatpush1.msra.mxu0 %v312
    %659 = vmatprep.subr.mxu0 0.0
    %660 = vmatpush1.msra.mxu0 %v313
    %661 = vmatprep.subr.mxu0 0.0
    %662 = vmatpush1.msra.mxu0 %v314
    %663 = vmatprep.subr.mxu0 0.0
    %664 = vmatpush1.msra.mxu0 %v315
    %665 = vmatprep.subr.mxu0 0.0
    %666 = vmatpush1.msra.mxu0 %v316
    %667 = vmatprep.subr.mxu0 0.0
    %668 = vmatpush1.msra.mxu0 %v317
    %669 = vmatprep.subr.mxu0 0.0
    %670 = vmatpush1.msra.mxu0 %v318
    %671 = vmatprep.subr.mxu0 0.0
    %672 = vmatpush1.msra.mxu0 %v319
    %673 = vmatprep.subr.mxu0 0.0
    %674 = vmatpush1.msra.mxu0 %v320
    %675 = vmatprep.subr.mxu0 0.0
    %676 = vmatpush1.msra.mxu0 %v321
    %677 = vmatprep.subr.mxu0 0.0
    %678 = vmatpush1.msra.mxu0 0.0
    %679 = vmatprep.subr.mxu0 0.0
    %680 = vmatpush1.msra.mxu0 0.0
    %681 = vmatprep.subr.mxu0 0.0
    %682 = vmatpush1.msra.mxu0 0.0
    %683 = vmatprep.subr.mxu0 0.0
    %684 = vmatpush1.msra.mxu0 0.0
    %685 = vmatprep.subr.mxu0 0.0
    %686 = vmatpush1.msra.mxu0 0.0
    %687 = vmatprep.subr.mxu0 0.0
    %688 = vmatpush1.msra.mxu0 0.0
    %689 = vmatprep.subr.mxu0 0.0
    %690 = vmatpush1.msra.mxu0 0.0
    %691 = vmatprep.subr.mxu0 0.0
    %692 = vmatpush1.msra.mxu0 0.0
    %693 = vmatprep.subr.mxu0 0.0
    %694 = vmatpush1.msra.mxu0 0.0
    %695 = vmatprep.subr.mxu0 0.0
    %696 = vmatpush1.msra.mxu0 0.0
    %697 = vmatprep.subr.mxu0 0.0
    %698 = vmatpush1.msra.mxu0 0.0
    %699 = vmatprep.subr.mxu0 0.0
    %700 = vmatpush1.msra.mxu0 0.0
    %701 = vmatprep.subr.mxu0 0.0
    %702 = vmatpush1.msra.mxu0 0.0
    %703 = vmatprep.subr.mxu0 0.0
    %704 = vmatpush1.msra.mxu0 0.0
    %705 = vmatprep.subr.mxu0 0.0
    %706 = vmatpush1.msra.mxu0 0.0
    %707 = vmatprep.subr.mxu0 0.0
    %708 = vmatpush1.msra.mxu0 0.0
    %709 = vmatprep.mubr.f32.mxu0 0.0
    %710 = vmatmul.mubr.f32.gmra.mrb[0].mxu0 %v208
    %v711 = vpop.f32.mrb[0].mxu0
    %v712 = vadd.f32 %v406, %v711
    %v713 = vpop.f32.mrb[0].mxu0
    %714 = vmatprep.mubr.f32.mxu0 0.0
    %715 = vmatmul.mubr.f32.gmra.mrb[0].mxu0 %v213
    %v716 = vpop.f32.mrb[0].mxu0
    %v717 = vadd.f32 %v411, %v716
    %v718 = vpop.f32.mrb[0].mxu0
    %719 = vmatprep.mubr.f32.mxu0 0.0
    %720 = vmatmul.mubr.f32.gmra.mrb[0].mxu0 %v218
    %v721 = vpop.f32.mrb[0].mxu0
    %v722 = vadd.f32 %v416, %v721
    %v723 = vpop.f32.mrb[0].mxu0
    %724 = vmatprep.mubr.f32.mxu0 0.0
    %725 = vmatmul.mubr.f32.gmra.mrb[0].mxu0 %v223
    %v726 = vpop.f32.mrb[0].mxu0
    %v727 = vadd.f32 %v421, %v726
    %v728 = vpop.f32.mrb[0].mxu0
    %729 = vdwg.mxu0
    %730 = vmatprep.subr.mxu0 0.0
    %731 = vmatpush1.msra.mxu0 %v425
    %732 = vmatprep.subr.mxu0 0.0
    %733 = vmatpush1.msra.mxu0 %v426
    %734 = vmatprep.subr.mxu0 0.0
    %735 = vmatpush1.msra.mxu0 %v427
    %736 = vmatprep.subr.mxu0 0.0
    %737 = vmatpush1.msra.mxu0 %v428
    %738 = vmatprep.subr.mxu0 0.0
    %739 = vmatpush1.msra.mxu0 %v429
    %740 = vmatprep.subr.mxu0 0.0
    %741 = vmatpush1.msra.mxu0 %v430
    %742 = vmatprep.subr.mxu0 0.0
    %743 = vmatpush1.msra.mxu0 %v431
    %744 = vmatprep.subr.mxu0 0.0
    %745 = vmatpush1.msra.mxu0 %v432
    %746 = vmatprep.subr.mxu0 0.0
    %747 = vmatpush1.msra.mxu0 %v433
    %748 = vmatprep.subr.mxu0 0.0
    %749 = vmatpush1.msra.mxu0 %v434
    %750 = vmatprep.subr.mxu0 0.0
    %751 = vmatpush1.msra.mxu0 %v435
    %752 = vmatprep.subr.mxu0 0.0
    %753 = vmatpush1.msra.mxu0 %v436
    %754 = vmatprep.subr.mxu0 0.0
    %755 = vmatpush1.msra.mxu0 %v437
    %756 = vmatprep.subr.mxu0 0.0
    %757 = vmatpush1.msra.mxu0 %v438
    %758 = vmatprep.subr.mxu0 0.0
    %759 = vmatpush1.msra.mxu0 %v439
    %760 = vmatprep.subr.mxu0 0.0
    %761 = vmatpush1.msra.mxu0 %v440
    %762 = vmatprep.subr.mxu0 0.0
    %763 = vmatpush1.msra.mxu0 0.0
    %764 = vmatprep.subr.mxu0 0.0
    %765 = vmatpush1.msra.mxu0 0.0
    %766 = vmatprep.subr.mxu0 0.0
    %767 = vmatpush1.msra.mxu0 0.0
    %768 = vmatprep.subr.mxu0 0.0
    %769 = vmatpush1.msra.mxu0 0.0
    %770 = vmatprep.subr.mxu0 0.0
    %771 = vmatpush1.msra.mxu0 0.0
    %772 = vmatprep.subr.mxu0 0.0
    %773 = vmatpush1.msra.mxu0 0.0
    %774 = vmatprep.subr.mxu0 0.0
    %775 = vmatpush1.msra.mxu0 0.0
    %776 = vmatprep.subr.mxu0 0.0
    %777 = vmatpush1.msra.mxu0 0.0
    %778 = vmatprep.subr.mxu0 0.0
    %779 = vmatpush1.msra.mxu0 0.0
    %780 = vmatprep.subr.mxu0 0.0
    %781 = vmatpush1.msra.mxu0 0.0
    %782 = vmatprep.subr.mxu0 0.0
    %783 = vmatpush1.msra.mxu0 0.0
    %784 = vmatprep.subr.mxu0 0.0
    %785 = vmatpush1.msra.mxu0 0.0
    %786 = vmatprep.subr.mxu0 0.0
    %787 = vmatpush1.msra.mxu0 0.0
    %788 = vmatprep.subr.mxu0 0.0
    %789 = vmatpush1.msra.mxu0 0.0
    %790 = vmatprep.subr.mxu0 0.0
    %791 = vmatpush1.msra.mxu0 0.0
    %792 = vmatprep.subr.mxu0 0.0
    %793 = vmatpush1.msra.mxu0 0.0
    %794 = vmatprep.mubr.f32.mxu0 0.0
    %795 = vmatmul.mubr.f32.gmra.mrb[0].mxu0 %v248
    %v796 = vpop.f32.mrb[0].mxu0
    %v797 = vadd.f32 %v525, %v796
    %v798 = vpop.f32.mrb[0].mxu0
    %799 = vmatprep.mubr.f32.mxu0 0.0
    %800 = vmatmul.mubr.f32.gmra.mrb[0].mxu0 %v253
    %v801 = vpop.f32.mrb[0].mxu0
    %v802 = vadd.f32 %v530, %v801
    %v803 = vpop.f32.mrb[0].mxu0
    %804 = vmatprep.mubr.f32.mxu0 0.0
    %805 = vmatmul.mubr.f32.gmra.mrb[0].mxu0 %v258
    %v806 = vpop.f32.mrb[0].mxu0
    %v807 = vadd.f32 %v535, %v806
    %v808 = vpop.f32.mrb[0].mxu0
    %809 = vmatprep.mubr.f32.mxu0 0.0
    %810 = vmatmul.mubr.f32.gmra.mrb[0].mxu0 %v263
    %v811 = vpop.f32.mrb[0].mxu0
    %v812 = vadd.f32 %v540, %v811
    %v813 = vpop.f32.mrb[0].mxu0
    %814 = vdwg.mxu0
    %v815 = vadd.f32 %v712, %v797
    %v816 = vadd.f32 %v717, %v802
    %v817 = vadd.f32 %v722, %v807
    %v818 = vadd.f32 %v727, %v812
    %v819 = vadd.f32 %v815, %v627
    %v820 = vadd.f32 %v816, %v632
    %v821 = vadd.f32 %v817, %v637
    %v822 = vadd.f32 %v818, %v642
    %v824 = vlaneseq
    %v825 = vshrl.u32 %v824, 7
    %v826 = vsub.s32 0, %v825
    %v827 = vrot.slane %v59, %v826
    %v829 = vadd.f32 %v827, %v819
    %v830 = vadd.f32 %v827, %v820
    %v831 = vadd.f32 %v827, %v821
    %v832 = vadd.f32 %v827, %v822
    %v833 = vld [vmem:[%s6] sm:$0x1]
    %v834 = vld [vmem:[%s4] sm:$0xff]
    %v835 = vld [vmem:[%s4 + $0x8] sm:$0xff]
    %v836 = vld [vmem:[%s4 + $0x10] sm:$0xff]
    %v837 = vld [vmem:[%s4 + $0x18] sm:$0xff]
    %v838 = vld [vmem:[%s4 + $0x20] sm:$0xff]
    %v839 = vld [vmem:[%s4 + $0x28] sm:$0xff]
    %v840 = vld [vmem:[%s4 + $0x30] sm:$0xff]
    %v841 = vld [vmem:[%s4 + $0x38] sm:$0xff]
    %v842 = vld [vmem:[%s4 + $0x40] sm:$0xff]
    %v843 = vld [vmem:[%s4 + $0x48] sm:$0xff]
    %v844 = vld [vmem:[%s4 + $0x50] sm:$0xff]
    %v845 = vld [vmem:[%s4 + $0x58] sm:$0xff]
    %v846 = vld [vmem:[%s4 + $0x60] sm:$0xff]
    %v847 = vld [vmem:[%s4 + $0x68] sm:$0xff]
    %v848 = vld [vmem:[%s4 + $0x70] sm:$0xff]
    %v849 = vld [vmem:[%s4 + $0x78] sm:$0xff]
    %v850 = vld [vmem:[%s4 + $0x80] sm:$0xff]
    %v851 = vld [vmem:[%s4 + $0x88] sm:$0xff]
    %v852 = vld [vmem:[%s4 + $0x90] sm:$0xff]
    %v853 = vld [vmem:[%s4 + $0x98] sm:$0xff]
    %v854 = vld [vmem:[%s4 + $0xa0] sm:$0xff]
    %v855 = vld [vmem:[%s4 + $0xa8] sm:$0xff]
    %v856 = vld [vmem:[%s4 + $0xb0] sm:$0xff]
    %v857 = vld [vmem:[%s4 + $0xb8] sm:$0xff]
    %v858 = vld [vmem:[%s4 + $0xc0] sm:$0xff]
    %v859 = vld [vmem:[%s4 + $0xc8] sm:$0xff]
    %v860 = vld [vmem:[%s4 + $0xd0] sm:$0xff]
    %v861 = vld [vmem:[%s4 + $0xd8] sm:$0xff]
    %v863 = vsel %vm80, %v834, 0
    %v866 = vsel %vm80, %v835, 0
    %v869 = vsel %vm80, %v836, 0
    %v872 = vsel %vm80, %v837, 0
    %v875 = vsel %vm80, %v838, 0
    %v878 = vsel %vm80, %v839, 0
    %v881 = vsel %vm80, %v840, 0
    %v884 = vsel %vm80, %v841, 0
    %v887 = vsel %vm80, %v842, 0
    %v890 = vsel %vm80, %v843, 0
    %v893 = vsel %vm80, %v844, 0
    %v896 = vsel %vm80, %v845, 0
    %v899 = vsel %vm80, %v846, 0
    %v902 = vsel %vm80, %v847, 0
    %v905 = vsel %vm80, %v848, 0
    %v908 = vsel %vm80, %v849, 0
    %v911 = vsel %vm80, %v850, 0
    %v914 = vsel %vm80, %v851, 0
    %v917 = vsel %vm80, %v852, 0
    %v920 = vsel %vm80, %v853, 0
    %v923 = vsel %vm80, %v854, 0
    %v926 = vsel %vm80, %v855, 0
    %v929 = vsel %vm80, %v856, 0
    %v932 = vsel %vm80, %v857, 0
    %v935 = vsel %vm80, %v858, 0
    %v938 = vsel %vm80, %v859, 0
    %v941 = vsel %vm80, %v860, 0
    %v944 = vsel %vm80, %v861, 0
    %946 = vmatprep.subr.mxu0 0.0
    %947 = vmatpush1.msra.mxu0 %v829
    %948 = vmatprep.subr.mxu0 0.0
    %949 = vmatpush1.msra.mxu0 %v830
    %950 = vmatprep.subr.mxu0 0.0
    %951 = vmatpush1.msra.mxu0 %v831
    %952 = vmatprep.subr.mxu0 0.0
    %953 = vmatpush1.msra.mxu0 %v832
    %954 = vmatprep.subr.mxu0 0.0
    %955 = vmatpush1.msra.mxu0 0.0
    %956 = vmatprep.subr.mxu0 0.0
    %957 = vmatpush1.msra.mxu0 0.0
    %958 = vmatprep.subr.mxu0 0.0
    %959 = vmatpush1.msra.mxu0 0.0
    %960 = vmatprep.subr.mxu0 0.0
    %961 = vmatpush1.msra.mxu0 0.0
    %962 = vmatprep.subr.mxu0 0.0
    %963 = vmatpush1.msra.mxu0 0.0
    %964 = vmatprep.subr.mxu0 0.0
    %965 = vmatpush1.msra.mxu0 0.0
    %966 = vmatprep.subr.mxu0 0.0
    %967 = vmatpush1.msra.mxu0 0.0
    %968 = vmatprep.subr.mxu0 0.0
    %969 = vmatpush1.msra.mxu0 0.0
    %970 = vmatprep.subr.mxu0 0.0
    %971 = vmatpush1.msra.mxu0 0.0
    %972 = vmatprep.subr.mxu0 0.0
    %973 = vmatpush1.msra.mxu0 0.0
    %974 = vmatprep.subr.mxu0 0.0
    %975 = vmatpush1.msra.mxu0 0.0
    %976 = vmatprep.subr.mxu0 0.0
    %977 = vmatpush1.msra.mxu0 0.0
    %978 = vmatprep.subr.mxu0 0.0
    %979 = vmatpush1.msra.mxu0 0.0
    %980 = vmatprep.subr.mxu0 0.0
    %981 = vmatpush1.msra.mxu0 0.0
    %982 = vmatprep.subr.mxu0 0.0
    %983 = vmatpush1.msra.mxu0 0.0
    %984 = vmatprep.subr.mxu0 0.0
    %985 = vmatpush1.msra.mxu0 0.0
    %986 = vmatprep.subr.mxu0 0.0
    %987 = vmatpush1.msra.mxu0 0.0
    %988 = vmatprep.subr.mxu0 0.0
    %989 = vmatpush1.msra.mxu0 0.0
    %990 = vmatprep.subr.mxu0 0.0
    %991 = vmatpush1.msra.mxu0 0.0
    %992 = vmatprep.subr.mxu0 0.0
    %993 = vmatpush1.msra.mxu0 0.0
    %994 = vmatprep.subr.mxu0 0.0
    %995 = vmatpush1.msra.mxu0 0.0
    %996 = vmatprep.subr.mxu0 0.0
    %997 = vmatpush1.msra.mxu0 0.0
    %998 = vmatprep.subr.mxu0 0.0
    %999 = vmatpush1.msra.mxu0 0.0
    %1000 = vmatprep.subr.mxu0 0.0
    %1001 = vmatpush1.msra.mxu0 0.0
    %1002 = vmatprep.subr.mxu0 0.0
    %1003 = vmatpush1.msra.mxu0 0.0
    %1004 = vmatprep.subr.mxu0 0.0
    %1005 = vmatpush1.msra.mxu0 0.0
    %1006 = vmatprep.subr.mxu0 0.0
    %1007 = vmatpush1.msra.mxu0 0.0
    %1008 = vmatprep.subr.mxu0 0.0
    %1009 = vmatpush1.msra.mxu0 0.0
    %1010 = vmatprep.mubr.f32.mxu0 0.0
    %1011 = vmatmul.mubr.f32.gmra.mrb[0].mxu0 %v863
    %v1012 = vpop.f32.mrb[0].mxu0
    %v1013 = vadd.f32 0.0, %v1012
    %v1014 = vpop.f32.mrb[0].mxu0
    %1015 = vmatprep.mubr.f32.mxu0 0.0
    %1016 = vmatmul.mubr.f32.gmra.mrb[0].mxu0 %v866
    %v1017 = vpop.f32.mrb[0].mxu0
    %v1018 = vadd.f32 0.0, %v1017
    %v1019 = vpop.f32.mrb[0].mxu0
    %1020 = vmatprep.mubr.f32.mxu0 0.0
    %1021 = vmatmul.mubr.f32.gmra.mrb[0].mxu0 %v869
    %v1022 = vpop.f32.mrb[0].mxu0
    %v1023 = vadd.f32 0.0, %v1022
    %v1024 = vpop.f32.mrb[0].mxu0
    %1025 = vmatprep.mubr.f32.mxu0 0.0
    %1026 = vmatmul.mubr.f32.gmra.mrb[0].mxu0 %v872
    %v1027 = vpop.f32.mrb[0].mxu0
    %v1028 = vadd.f32 0.0, %v1027
    %v1029 = vpop.f32.mrb[0].mxu0
    %1030 = vmatprep.mubr.f32.mxu0 0.0
    %1031 = vmatmul.mubr.f32.gmra.mrb[0].mxu0 %v875
    %v1032 = vpop.f32.mrb[0].mxu0
    %v1033 = vadd.f32 0.0, %v1032
    %v1034 = vpop.f32.mrb[0].mxu0
    %1035 = vmatprep.mubr.f32.mxu0 0.0
    %1036 = vmatmul.mubr.f32.gmra.mrb[0].mxu0 %v878
    %v1037 = vpop.f32.mrb[0].mxu0
    %v1038 = vadd.f32 0.0, %v1037
    %v1039 = vpop.f32.mrb[0].mxu0
    %1040 = vmatprep.mubr.f32.mxu0 0.0
    %1041 = vmatmul.mubr.f32.gmra.mrb[0].mxu0 %v881
    %v1042 = vpop.f32.mrb[0].mxu0
    %v1043 = vadd.f32 0.0, %v1042
    %v1044 = vpop.f32.mrb[0].mxu0
    %1045 = vmatprep.mubr.f32.mxu0 0.0
    %1046 = vmatmul.mubr.f32.gmra.mrb[0].mxu0 %v884
    %v1047 = vpop.f32.mrb[0].mxu0
    %v1048 = vadd.f32 0.0, %v1047
    %v1049 = vpop.f32.mrb[0].mxu0
    %1050 = vmatprep.mubr.f32.mxu0 0.0
    %1051 = vmatmul.mubr.f32.gmra.mrb[0].mxu0 %v887
    %v1052 = vpop.f32.mrb[0].mxu0
    %v1053 = vadd.f32 0.0, %v1052
    %v1054 = vpop.f32.mrb[0].mxu0
    %1055 = vmatprep.mubr.f32.mxu0 0.0
    %1056 = vmatmul.mubr.f32.gmra.mrb[0].mxu0 %v890
    %v1057 = vpop.f32.mrb[0].mxu0
    %v1058 = vadd.f32 0.0, %v1057
    %v1059 = vpop.f32.mrb[0].mxu0
    %1060 = vmatprep.mubr.f32.mxu0 0.0
    %1061 = vmatmul.mubr.f32.gmra.mrb[0].mxu0 %v893
    %v1062 = vpop.f32.mrb[0].mxu0
    %v1063 = vadd.f32 0.0, %v1062
    %v1064 = vpop.f32.mrb[0].mxu0
    %1065 = vmatprep.mubr.f32.mxu0 0.0
    %1066 = vmatmul.mubr.f32.gmra.mrb[0].mxu0 %v896
    %v1067 = vpop.f32.mrb[0].mxu0
    %v1068 = vadd.f32 0.0, %v1067
    %v1069 = vpop.f32.mrb[0].mxu0
    %1070 = vmatprep.mubr.f32.mxu0 0.0
    %1071 = vmatmul.mubr.f32.gmra.mrb[0].mxu0 %v899
    %v1072 = vpop.f32.mrb[0].mxu0
    %v1073 = vadd.f32 0.0, %v1072
    %v1074 = vpop.f32.mrb[0].mxu0
    %1075 = vmatprep.mubr.f32.mxu0 0.0
    %1076 = vmatmul.mubr.f32.gmra.mrb[0].mxu0 %v902
    %v1077 = vpop.f32.mrb[0].mxu0
    %v1078 = vadd.f32 0.0, %v1077
    %v1079 = vpop.f32.mrb[0].mxu0
    %1080 = vmatprep.mubr.f32.mxu0 0.0
    %1081 = vmatmul.mubr.f32.gmra.mrb[0].mxu0 %v905
    %v1082 = vpop.f32.mrb[0].mxu0
    %v1083 = vadd.f32 0.0, %v1082
    %v1084 = vpop.f32.mrb[0].mxu0
    %1085 = vmatprep.mubr.f32.mxu0 0.0
    %1086 = vmatmul.mubr.f32.gmra.mrb[0].mxu0 %v908
    %v1087 = vpop.f32.mrb[0].mxu0
    %v1088 = vadd.f32 0.0, %v1087
    %v1089 = vpop.f32.mrb[0].mxu0
    %1090 = vmatprep.mubr.f32.mxu0 0.0
    %1091 = vmatmul.mubr.f32.gmra.mrb[0].mxu0 %v911
    %v1092 = vpop.f32.mrb[0].mxu0
    %v1093 = vadd.f32 0.0, %v1092
    %v1094 = vpop.f32.mrb[0].mxu0
    %1095 = vmatprep.mubr.f32.mxu0 0.0
    %1096 = vmatmul.mubr.f32.gmra.mrb[0].mxu0 %v914
    %v1097 = vpop.f32.mrb[0].mxu0
    %v1098 = vadd.f32 0.0, %v1097
    %v1099 = vpop.f32.mrb[0].mxu0
    %1100 = vmatprep.mubr.f32.mxu0 0.0
    %1101 = vmatmul.mubr.f32.gmra.mrb[0].mxu0 %v917
    %v1102 = vpop.f32.mrb[0].mxu0
    %v1103 = vadd.f32 0.0, %v1102
    %v1104 = vpop.f32.mrb[0].mxu0
    %1105 = vmatprep.mubr.f32.mxu0 0.0
    %1106 = vmatmul.mubr.f32.gmra.mrb[0].mxu0 %v920
    %v1107 = vpop.f32.mrb[0].mxu0
    %v1108 = vadd.f32 0.0, %v1107
    %v1109 = vpop.f32.mrb[0].mxu0
    %1110 = vmatprep.mubr.f32.mxu0 0.0
    %1111 = vmatmul.mubr.f32.gmra.mrb[0].mxu0 %v923
    %v1112 = vpop.f32.mrb[0].mxu0
    %v1113 = vadd.f32 0.0, %v1112
    %v1114 = vpop.f32.mrb[0].mxu0
    %1115 = vmatprep.mubr.f32.mxu0 0.0
    %1116 = vmatmul.mubr.f32.gmra.mrb[0].mxu0 %v926
    %v1117 = vpop.f32.mrb[0].mxu0
    %v1118 = vadd.f32 0.0, %v1117
    %v1119 = vpop.f32.mrb[0].mxu0
    %1120 = vmatprep.mubr.f32.mxu0 0.0
    %1121 = vmatmul.mubr.f32.gmra.mrb[0].mxu0 %v929
    %v1122 = vpop.f32.mrb[0].mxu0
    %v1123 = vadd.f32 0.0, %v1122
    %v1124 = vpop.f32.mrb[0].mxu0
    %1125 = vmatprep.mubr.f32.mxu0 0.0
    %1126 = vmatmul.mubr.f32.gmra.mrb[0].mxu0 %v932
    %v1127 = vpop.f32.mrb[0].mxu0
    %v1128 = vadd.f32 0.0, %v1127
    %v1129 = vpop.f32.mrb[0].mxu0
    %1130 = vmatprep.mubr.f32.mxu0 0.0
    %1131 = vmatmul.mubr.f32.gmra.mrb[0].mxu0 %v935
    %v1132 = vpop.f32.mrb[0].mxu0
    %v1133 = vadd.f32 0.0, %v1132
    %v1134 = vpop.f32.mrb[0].mxu0
    %1135 = vmatprep.mubr.f32.mxu0 0.0
    %1136 = vmatmul.mubr.f32.gmra.mrb[0].mxu0 %v938
    %v1137 = vpop.f32.mrb[0].mxu0
    %v1138 = vadd.f32 0.0, %v1137
    %v1139 = vpop.f32.mrb[0].mxu0
    %1140 = vmatprep.mubr.f32.mxu0 0.0
    %1141 = vmatmul.mubr.f32.gmra.mrb[0].mxu0 %v941
    %v1142 = vpop.f32.mrb[0].mxu0
    %v1143 = vadd.f32 0.0, %v1142
    %v1144 = vpop.f32.mrb[0].mxu0
    %1145 = vmatprep.mubr.f32.mxu0 0.0
    %1146 = vmatmul.mubr.f32.gmra.mrb[0].mxu0 %v944
    %v1147 = vpop.f32.mrb[0].mxu0
    %v1148 = vadd.f32 0.0, %v1147
    %v1149 = vpop.f32.mrb[0].mxu0
    %1150 = vdwg.mxu0
    %v1151 = vld [vmem:[#allocation5] sm:$0xff]
    %v1152 = vld [vmem:[#allocation5 + $0x8] sm:$0xff]
    %v1153 = vld [vmem:[#allocation5 + $0x10] sm:$0xff]
    %v1154 = vld [vmem:[#allocation5 + $0x18] sm:$0xff]
    %v1155 = vld [vmem:[#allocation5 + $0x20] sm:$0xff]
    %v1156 = vld [vmem:[#allocation5 + $0x28] sm:$0xff]
    %v1157 = vld [vmem:[#allocation5 + $0x30] sm:$0xff]
    %v1158 = vld [vmem:[#allocation5 + $0x38] sm:$0xff]
    %v1159 = vld [vmem:[#allocation5 + $0x40] sm:$0xff]
    %v1160 = vld [vmem:[#allocation5 + $0x48] sm:$0xff]
    %v1161 = vld [vmem:[#allocation5 + $0x50] sm:$0xff]
    %v1162 = vld [vmem:[#allocation5 + $0x58] sm:$0xff]
    %v1163 = vld [vmem:[#allocation5 + $0x60] sm:$0xff]
    %v1164 = vld [vmem:[#allocation5 + $0x68] sm:$0xff]
    %v1165 = vld [vmem:[#allocation5 + $0x70] sm:$0xff]
    %v1166 = vld [vmem:[#allocation5 + $0x78] sm:$0xff]
    %s1167 = scalar_lea.vmem [#allocation5], 128
    %v1168 = vld [vmem:[%s1167] sm:$0xff]
    %v1169 = vld [vmem:[%s1167 + $0x8] sm:$0xff]
    %v1170 = vld [vmem:[%s1167 + $0x10] sm:$0xff]
    %v1171 = vld [vmem:[%s1167 + $0x18] sm:$0xff]
    %v1172 = vld [vmem:[%s1167 + $0x20] sm:$0xff]
    %v1173 = vld [vmem:[%s1167 + $0x28] sm:$0xff]
    %v1174 = vld [vmem:[%s1167 + $0x30] sm:$0xff]
    %v1175 = vld [vmem:[%s1167 + $0x38] sm:$0xff]
    %v1176 = vld [vmem:[%s1167 + $0x40] sm:$0xff]
    %v1177 = vld [vmem:[%s1167 + $0x48] sm:$0xff]
    %v1178 = vld [vmem:[%s1167 + $0x50] sm:$0xff]
    %v1179 = vld [vmem:[%s1167 + $0x58] sm:$0xff]
    %v1180 = vld [vmem:[%s1167 + $0x60] sm:$0xff]
    %v1181 = vld [vmem:[%s1167 + $0x68] sm:$0xff]
    %v1182 = vld [vmem:[%s1167 + $0x70] sm:$0xff]
    %v1183 = vld [vmem:[%s1167 + $0x78] sm:$0xff]
    %1184 = vmatprep.subr.mxu0 0.0
    %1185 = vmatpush1.msra.mxu0 %v1168
    %1186 = vmatprep.subr.mxu0 0.0
    %1187 = vmatpush1.msra.mxu0 %v1169
    %1188 = vmatprep.subr.mxu0 0.0
    %1189 = vmatpush1.msra.mxu0 %v1170
    %1190 = vmatprep.subr.mxu0 0.0
    %1191 = vmatpush1.msra.mxu0 %v1171
    %1192 = vmatprep.subr.mxu0 0.0
    %1193 = vmatpush1.msra.mxu0 %v1172
    %1194 = vmatprep.subr.mxu0 0.0
    %1195 = vmatpush1.msra.mxu0 %v1173
    %1196 = vmatprep.subr.mxu0 0.0
    %1197 = vmatpush1.msra.mxu0 %v1174
    %1198 = vmatprep.subr.mxu0 0.0
    %1199 = vmatpush1.msra.mxu0 %v1175
    %1200 = vmatprep.subr.mxu0 0.0
    %1201 = vmatpush1.msra.mxu0 %v1176
    %1202 = vmatprep.subr.mxu0 0.0
    %1203 = vmatpush1.msra.mxu0 %v1177
    %1204 = vmatprep.subr.mxu0 0.0
    %1205 = vmatpush1.msra.mxu0 %v1178
    %1206 = vmatprep.subr.mxu0 0.0
    %1207 = vmatpush1.msra.mxu0 %v1179
    %1208 = vmatprep.subr.mxu0 0.0
    %1209 = vmatpush1.msra.mxu0 %v1180
    %1210 = vmatprep.subr.mxu0 0.0
    %1211 = vmatpush1.msra.mxu0 %v1181
    %1212 = vmatprep.subr.mxu0 0.0
    %1213 = vmatpush1.msra.mxu0 %v1182
    %1214 = vmatprep.subr.mxu0 0.0
    %1215 = vmatpush1.msra.mxu0 %v1183
    %1216 = vmatprep.subr.mxu0 0.0
    %1217 = vmatpush1.msra.mxu0 0.0
    %1218 = vmatprep.subr.mxu0 0.0
    %1219 = vmatpush1.msra.mxu0 0.0
    %1220 = vmatprep.subr.mxu0 0.0
    %1221 = vmatpush1.msra.mxu0 0.0
    %1222 = vmatprep.subr.mxu0 0.0
    %1223 = vmatpush1.msra.mxu0 0.0
    %1224 = vmatprep.subr.mxu0 0.0
    %1225 = vmatpush1.msra.mxu0 0.0
    %1226 = vmatprep.subr.mxu0 0.0
    %1227 = vmatpush1.msra.mxu0 0.0
    %1228 = vmatprep.subr.mxu0 0.0
    %1229 = vmatpush1.msra.mxu0 0.0
    %1230 = vmatprep.subr.mxu0 0.0
    %1231 = vmatpush1.msra.mxu0 0.0
    %1232 = vmatprep.subr.mxu0 0.0
    %1233 = vmatpush1.msra.mxu0 0.0
    %1234 = vmatprep.subr.mxu0 0.0
    %1235 = vmatpush1.msra.mxu0 0.0
    %1236 = vmatprep.subr.mxu0 0.0
    %1237 = vmatpush1.msra.mxu0 0.0
    %1238 = vmatprep.subr.mxu0 0.0
    %1239 = vmatpush1.msra.mxu0 0.0
    %1240 = vmatprep.subr.mxu0 0.0
    %1241 = vmatpush1.msra.mxu0 0.0
    %1242 = vmatprep.subr.mxu0 0.0
    %1243 = vmatpush1.msra.mxu0 0.0
    %1244 = vmatprep.subr.mxu0 0.0
    %1245 = vmatpush1.msra.mxu0 0.0
    %1246 = vmatprep.subr.mxu0 0.0
    %1247 = vmatpush1.msra.mxu0 0.0
    %1248 = vmatprep.mubr.f32.mxu0 0.0
    %1249 = vmatmul.mubr.f32.gmra.mrb[0].mxu0 %v1033
    %v1250 = vpop.f32.mrb[0].mxu0
    %v1251 = vadd.f32 0.0, %v1250
    %v1252 = vpop.f32.mrb[0].mxu0
    %1253 = vmatprep.mubr.f32.mxu0 0.0
    %1254 = vmatmul.mubr.f32.gmra.mrb[0].mxu0 %v1038
    %v1255 = vpop.f32.mrb[0].mxu0
    %v1256 = vadd.f32 0.0, %v1255
    %v1257 = vpop.f32.mrb[0].mxu0
    %1258 = vmatprep.mubr.f32.mxu0 0.0
    %1259 = vmatmul.mubr.f32.gmra.mrb[0].mxu0 %v1043
    %v1260 = vpop.f32.mrb[0].mxu0
    %v1261 = vadd.f32 0.0, %v1260
    %v1262 = vpop.f32.mrb[0].mxu0
    %1263 = vmatprep.mubr.f32.mxu0 0.0
    %1264 = vmatmul.mubr.f32.gmra.mrb[0].mxu0 %v1048
    %v1265 = vpop.f32.mrb[0].mxu0
    %v1266 = vadd.f32 0.0, %v1265
    %v1267 = vpop.f32.mrb[0].mxu0
    %1268 = vdwg.mxu0
    %s1269 = scalar_lea.vmem [#allocation5], 256
    %v1270 = vld [vmem:[%s1269] sm:$0xff]
    %v1271 = vld [vmem:[%s1269 + $0x8] sm:$0xff]
    %v1272 = vld [vmem:[%s1269 + $0x10] sm:$0xff]
    %v1273 = vld [vmem:[%s1269 + $0x18] sm:$0xff]
    %v1274 = vld [vmem:[%s1269 + $0x20] sm:$0xff]
    %v1275 = vld [vmem:[%s1269 + $0x28] sm:$0xff]
    %v1276 = vld [vmem:[%s1269 + $0x30] sm:$0xff]
    %v1277 = vld [vmem:[%s1269 + $0x38] sm:$0xff]
    %v1278 = vld [vmem:[%s1269 + $0x40] sm:$0xff]
    %v1279 = vld [vmem:[%s1269 + $0x48] sm:$0xff]
    %v1280 = vld [vmem:[%s1269 + $0x50] sm:$0xff]
    %v1281 = vld [vmem:[%s1269 + $0x58] sm:$0xff]
    %v1282 = vld [vmem:[%s1269 + $0x60] sm:$0xff]
    %v1283 = vld [vmem:[%s1269 + $0x68] sm:$0xff]
    %v1284 = vld [vmem:[%s1269 + $0x70] sm:$0xff]
    %v1285 = vld [vmem:[%s1269 + $0x78] sm:$0xff]
    %s1286 = scalar_lea.vmem [#allocation5], 384
    %v1287 = vld [vmem:[%s1286] sm:$0xff]
    %v1288 = vld [vmem:[%s1286 + $0x8] sm:$0xff]
    %v1289 = vld [vmem:[%s1286 + $0x10] sm:$0xff]
    %v1290 = vld [vmem:[%s1286 + $0x18] sm:$0xff]
    %v1291 = vld [vmem:[%s1286 + $0x20] sm:$0xff]
    %v1292 = vld [vmem:[%s1286 + $0x28] sm:$0xff]
    %v1293 = vld [vmem:[%s1286 + $0x30] sm:$0xff]
    %v1294 = vld [vmem:[%s1286 + $0x38] sm:$0xff]
    %v1295 = vld [vmem:[%s1286 + $0x40] sm:$0xff]
    %v1296 = vld [vmem:[%s1286 + $0x48] sm:$0xff]
    %v1297 = vld [vmem:[%s1286 + $0x50] sm:$0xff]
    %v1298 = vld [vmem:[%s1286 + $0x58] sm:$0xff]
    %v1299 = vld [vmem:[%s1286 + $0x60] sm:$0xff]
    %v1300 = vld [vmem:[%s1286 + $0x68] sm:$0xff]
    %v1301 = vld [vmem:[%s1286 + $0x70] sm:$0xff]
    %v1302 = vld [vmem:[%s1286 + $0x78] sm:$0xff]
    %1303 = vmatprep.subr.mxu0 0.0
    %1304 = vmatpush1.msra.mxu0 %v1287
    %1305 = vmatprep.subr.mxu0 0.0
    %1306 = vmatpush1.msra.mxu0 %v1288
    %1307 = vmatprep.subr.mxu0 0.0
    %1308 = vmatpush1.msra.mxu0 %v1289
    %1309 = vmatprep.subr.mxu0 0.0
    %1310 = vmatpush1.msra.mxu0 %v1290
    %1311 = vmatprep.subr.mxu0 0.0
    %1312 = vmatpush1.msra.mxu0 %v1291
    %1313 = vmatprep.subr.mxu0 0.0
    %1314 = vmatpush1.msra.mxu0 %v1292
    %1315 = vmatprep.subr.mxu0 0.0
    %1316 = vmatpush1.msra.mxu0 %v1293
    %1317 = vmatprep.subr.mxu0 0.0
    %1318 = vmatpush1.msra.mxu0 %v1294
    %1319 = vmatprep.subr.mxu0 0.0
    %1320 = vmatpush1.msra.mxu0 %v1295
    %1321 = vmatprep.subr.mxu0 0.0
    %1322 = vmatpush1.msra.mxu0 %v1296
    %1323 = vmatprep.subr.mxu0 0.0
    %1324 = vmatpush1.msra.mxu0 %v1297
    %1325 = vmatprep.subr.mxu0 0.0
    %1326 = vmatpush1.msra.mxu0 %v1298
    %1327 = vmatprep.subr.mxu0 0.0
    %1328 = vmatpush1.msra.mxu0 %v1299
    %1329 = vmatprep.subr.mxu0 0.0
    %1330 = vmatpush1.msra.mxu0 %v1300
    %1331 = vmatprep.subr.mxu0 0.0
    %1332 = vmatpush1.msra.mxu0 %v1301
    %1333 = vmatprep.subr.mxu0 0.0
    %1334 = vmatpush1.msra.mxu0 %v1302
    %1335 = vmatprep.subr.mxu0 0.0
    %1336 = vmatpush1.msra.mxu0 0.0
    %1337 = vmatprep.subr.mxu0 0.0
    %1338 = vmatpush1.msra.mxu0 0.0
    %1339 = vmatprep.subr.mxu0 0.0
    %1340 = vmatpush1.msra.mxu0 0.0
    %1341 = vmatprep.subr.mxu0 0.0
    %1342 = vmatpush1.msra.mxu0 0.0
    %1343 = vmatprep.subr.mxu0 0.0
    %1344 = vmatpush1.msra.mxu0 0.0
    %1345 = vmatprep.subr.mxu0 0.0
    %1346 = vmatpush1.msra.mxu0 0.0
    %1347 = vmatprep.subr.mxu0 0.0
    %1348 = vmatpush1.msra.mxu0 0.0
    %1349 = vmatprep.subr.mxu0 0.0
    %1350 = vmatpush1.msra.mxu0 0.0
    %1351 = vmatprep.subr.mxu0 0.0
    %1352 = vmatpush1.msra.mxu0 0.0
    %1353 = vmatprep.subr.mxu0 0.0
    %1354 = vmatpush1.msra.mxu0 0.0
    %1355 = vmatprep.subr.mxu0 0.0
    %1356 = vmatpush1.msra.mxu0 0.0
    %1357 = vmatprep.subr.mxu0 0.0
    %1358 = vmatpush1.msra.mxu0 0.0
    %1359 = vmatprep.subr.mxu0 0.0
    %1360 = vmatpush1.msra.mxu0 0.0
    %1361 = vmatprep.subr.mxu0 0.0
    %1362 = vmatpush1.msra.mxu0 0.0
    %1363 = vmatprep.subr.mxu0 0.0
    %1364 = vmatpush1.msra.mxu0 0.0
    %1365 = vmatprep.subr.mxu0 0.0
    %1366 = vmatpush1.msra.mxu0 0.0
    %1367 = vmatprep.mubr.f32.mxu0 0.0
    %1368 = vmatmul.mubr.f32.gmra.mrb[0].mxu0 %v1073
    %v1369 = vpop.f32.mrb[0].mxu0
    %v1370 = vadd.f32 0.0, %v1369
    %v1371 = vpop.f32.mrb[0].mxu0
    %1372 = vmatprep.mubr.f32.mxu0 0.0
    %1373 = vmatmul.mubr.f32.gmra.mrb[0].mxu0 %v1078
    %v1374 = vpop.f32.mrb[0].mxu0
    %v1375 = vadd.f32 0.0, %v1374
    %v1376 = vpop.f32.mrb[0].mxu0
    %1377 = vmatprep.mubr.f32.mxu0 0.0
    %1378 = vmatmul.mubr.f32.gmra.mrb[0].mxu0 %v1083
    %v1379 = vpop.f32.mrb[0].mxu0
    %v1380 = vadd.f32 0.0, %v1379
    %v1381 = vpop.f32.mrb[0].mxu0
    %1382 = vmatprep.mubr.f32.mxu0 0.0
    %1383 = vmatmul.mubr.f32.gmra.mrb[0].mxu0 %v1088
    %v1384 = vpop.f32.mrb[0].mxu0
    %v1385 = vadd.f32 0.0, %v1384
    %v1386 = vpop.f32.mrb[0].mxu0
    %1387 = vdwg.mxu0
    %s1388 = scalar_lea.vmem [#allocation5], 512
    %v1389 = vld [vmem:[%s1388] sm:$0xff]
    %v1390 = vld [vmem:[%s1388 + $0x8] sm:$0xff]
    %v1391 = vld [vmem:[%s1388 + $0x10] sm:$0xff]
    %v1392 = vld [vmem:[%s1388 + $0x18] sm:$0xff]
    %v1393 = vld [vmem:[%s1388 + $0x20] sm:$0xff]
    %v1394 = vld [vmem:[%s1388 + $0x28] sm:$0xff]
    %v1395 = vld [vmem:[%s1388 + $0x30] sm:$0xff]
    %v1396 = vld [vmem:[%s1388 + $0x38] sm:$0xff]
    %v1397 = vld [vmem:[%s1388 + $0x40] sm:$0xff]
    %v1398 = vld [vmem:[%s1388 + $0x48] sm:$0xff]
    %v1399 = vld [vmem:[%s1388 + $0x50] sm:$0xff]
    %v1400 = vld [vmem:[%s1388 + $0x58] sm:$0xff]
    %v1401 = vld [vmem:[%s1388 + $0x60] sm:$0xff]
    %v1402 = vld [vmem:[%s1388 + $0x68] sm:$0xff]
    %v1403 = vld [vmem:[%s1388 + $0x70] sm:$0xff]
    %v1404 = vld [vmem:[%s1388 + $0x78] sm:$0xff]
    %s1405 = scalar_lea.vmem [#allocation5], 640
    %v1406 = vld [vmem:[%s1405] sm:$0xff]
    %v1407 = vld [vmem:[%s1405 + $0x8] sm:$0xff]
    %v1408 = vld [vmem:[%s1405 + $0x10] sm:$0xff]
    %v1409 = vld [vmem:[%s1405 + $0x18] sm:$0xff]
    %v1410 = vld [vmem:[%s1405 + $0x20] sm:$0xff]
    %v1411 = vld [vmem:[%s1405 + $0x28] sm:$0xff]
    %v1412 = vld [vmem:[%s1405 + $0x30] sm:$0xff]
    %v1413 = vld [vmem:[%s1405 + $0x38] sm:$0xff]
    %v1414 = vld [vmem:[%s1405 + $0x40] sm:$0xff]
    %v1415 = vld [vmem:[%s1405 + $0x48] sm:$0xff]
    %v1416 = vld [vmem:[%s1405 + $0x50] sm:$0xff]
    %v1417 = vld [vmem:[%s1405 + $0x58] sm:$0xff]
    %v1418 = vld [vmem:[%s1405 + $0x60] sm:$0xff]
    %v1419 = vld [vmem:[%s1405 + $0x68] sm:$0xff]
    %v1420 = vld [vmem:[%s1405 + $0x70] sm:$0xff]
    %v1421 = vld [vmem:[%s1405 + $0x78] sm:$0xff]
    %1422 = vmatprep.subr.mxu0 0.0
    %1423 = vmatpush1.msra.mxu0 %v1406
    %1424 = vmatprep.subr.mxu0 0.0
    %1425 = vmatpush1.msra.mxu0 %v1407
    %1426 = vmatprep.subr.mxu0 0.0
    %1427 = vmatpush1.msra.mxu0 %v1408
    %1428 = vmatprep.subr.mxu0 0.0
    %1429 = vmatpush1.msra.mxu0 %v1409
    %1430 = vmatprep.subr.mxu0 0.0
    %1431 = vmatpush1.msra.mxu0 %v1410
    %1432 = vmatprep.subr.mxu0 0.0
    %1433 = vmatpush1.msra.mxu0 %v1411
    %1434 = vmatprep.subr.mxu0 0.0
    %1435 = vmatpush1.msra.mxu0 %v1412
    %1436 = vmatprep.subr.mxu0 0.0
    %1437 = vmatpush1.msra.mxu0 %v1413
    %1438 = vmatprep.subr.mxu0 0.0
    %1439 = vmatpush1.msra.mxu0 %v1414
    %1440 = vmatprep.subr.mxu0 0.0
    %1441 = vmatpush1.msra.mxu0 %v1415
    %1442 = vmatprep.subr.mxu0 0.0
    %1443 = vmatpush1.msra.mxu0 %v1416
    %1444 = vmatprep.subr.mxu0 0.0
    %1445 = vmatpush1.msra.mxu0 %v1417
    %1446 = vmatprep.subr.mxu0 0.0
    %1447 = vmatpush1.msra.mxu0 %v1418
    %1448 = vmatprep.subr.mxu0 0.0
    %1449 = vmatpush1.msra.mxu0 %v1419
    %1450 = vmatprep.subr.mxu0 0.0
    %1451 = vmatpush1.msra.mxu0 %v1420
    %1452 = vmatprep.subr.mxu0 0.0
    %1453 = vmatpush1.msra.mxu0 %v1421
    %1454 = vmatprep.subr.mxu0 0.0
    %1455 = vmatpush1.msra.mxu0 0.0
    %1456 = vmatprep.subr.mxu0 0.0
    %1457 = vmatpush1.msra.mxu0 0.0
    %1458 = vmatprep.subr.mxu0 0.0
    %1459 = vmatpush1.msra.mxu0 0.0
    %1460 = vmatprep.subr.mxu0 0.0
    %1461 = vmatpush1.msra.mxu0 0.0
    %1462 = vmatprep.subr.mxu0 0.0
    %1463 = vmatpush1.msra.mxu0 0.0
    %1464 = vmatprep.subr.mxu0 0.0
    %1465 = vmatpush1.msra.mxu0 0.0
    %1466 = vmatprep.subr.mxu0 0.0
    %1467 = vmatpush1.msra.mxu0 0.0
    %1468 = vmatprep.subr.mxu0 0.0
    %1469 = vmatpush1.msra.mxu0 0.0
    %1470 = vmatprep.subr.mxu0 0.0
    %1471 = vmatpush1.msra.mxu0 0.0
    %1472 = vmatprep.subr.mxu0 0.0
    %1473 = vmatpush1.msra.mxu0 0.0
    %1474 = vmatprep.subr.mxu0 0.0
    %1475 = vmatpush1.msra.mxu0 0.0
    %1476 = vmatprep.subr.mxu0 0.0
    %1477 = vmatpush1.msra.mxu0 0.0
    %1478 = vmatprep.subr.mxu0 0.0
    %1479 = vmatpush1.msra.mxu0 0.0
    %1480 = vmatprep.subr.mxu0 0.0
    %1481 = vmatpush1.msra.mxu0 0.0
    %1482 = vmatprep.subr.mxu0 0.0
    %1483 = vmatpush1.msra.mxu0 0.0
    %1484 = vmatprep.subr.mxu0 0.0
    %1485 = vmatpush1.msra.mxu0 0.0
    %1486 = vmatprep.mubr.f32.mxu0 0.0
    %1487 = vmatmul.mubr.f32.gmra.mrb[0].mxu0 %v1113
    %v1488 = vpop.f32.mrb[0].mxu0
    %v1489 = vadd.f32 0.0, %v1488
    %v1490 = vpop.f32.mrb[0].mxu0
    %1491 = vmatprep.mubr.f32.mxu0 0.0
    %1492 = vmatmul.mubr.f32.gmra.mrb[0].mxu0 %v1118
    %v1493 = vpop.f32.mrb[0].mxu0
    %v1494 = vadd.f32 0.0, %v1493
    %v1495 = vpop.f32.mrb[0].mxu0
    %1496 = vmatprep.mubr.f32.mxu0 0.0
    %1497 = vmatmul.mubr.f32.gmra.mrb[0].mxu0 %v1123
    %v1498 = vpop.f32.mrb[0].mxu0
    %v1499 = vadd.f32 0.0, %v1498
    %v1500 = vpop.f32.mrb[0].mxu0
    %1501 = vmatprep.mubr.f32.mxu0 0.0
    %1502 = vmatmul.mubr.f32.gmra.mrb[0].mxu0 %v1128
    %v1503 = vpop.f32.mrb[0].mxu0
    %v1504 = vadd.f32 0.0, %v1503
    %v1505 = vpop.f32.mrb[0].mxu0
    %1506 = vdwg.mxu0
    %s1507 = scalar_lea.vmem [#allocation5], 768
    %v1508 = vld [vmem:[%s1507] sm:$0xff]
    %v1509 = vld [vmem:[%s1507 + $0x8] sm:$0xff]
    %v1510 = vld [vmem:[%s1507 + $0x10] sm:$0xff]
    %v1511 = vld [vmem:[%s1507 + $0x18] sm:$0xff]
    %v1512 = vld [vmem:[%s1507 + $0x20] sm:$0xff]
    %v1513 = vld [vmem:[%s1507 + $0x28] sm:$0xff]
    %v1514 = vld [vmem:[%s1507 + $0x30] sm:$0xff]
    %v1515 = vld [vmem:[%s1507 + $0x38] sm:$0xff]
    %v1516 = vld [vmem:[%s1507 + $0x40] sm:$0xff]
    %v1517 = vld [vmem:[%s1507 + $0x48] sm:$0xff]
    %v1518 = vld [vmem:[%s1507 + $0x50] sm:$0xff]
    %v1519 = vld [vmem:[%s1507 + $0x58] sm:$0xff]
    %v1520 = vld [vmem:[%s1507 + $0x60] sm:$0xff]
    %v1521 = vld [vmem:[%s1507 + $0x68] sm:$0xff]
    %v1522 = vld [vmem:[%s1507 + $0x70] sm:$0xff]
    %v1523 = vld [vmem:[%s1507 + $0x78] sm:$0xff]
    %1524 = vmatprep.subr.mxu0 0.0
    %1525 = vmatpush1.msra.mxu0 %v1508
    %1526 = vmatprep.subr.mxu0 0.0
    %1527 = vmatpush1.msra.mxu0 %v1509
    %1528 = vmatprep.subr.mxu0 0.0
    %1529 = vmatpush1.msra.mxu0 %v1510
    %1530 = vmatprep.subr.mxu0 0.0
    %1531 = vmatpush1.msra.mxu0 %v1511
    %1532 = vmatprep.subr.mxu0 0.0
    %1533 = vmatpush1.msra.mxu0 %v1512
    %1534 = vmatprep.subr.mxu0 0.0
    %1535 = vmatpush1.msra.mxu0 %v1513
    %1536 = vmatprep.subr.mxu0 0.0
    %1537 = vmatpush1.msra.mxu0 %v1514
    %1538 = vmatprep.subr.mxu0 0.0
    %1539 = vmatpush1.msra.mxu0 %v1515
    %1540 = vmatprep.subr.mxu0 0.0
    %1541 = vmatpush1.msra.mxu0 %v1516
    %1542 = vmatprep.subr.mxu0 0.0
    %1543 = vmatpush1.msra.mxu0 %v1517
    %1544 = vmatprep.subr.mxu0 0.0
    %1545 = vmatpush1.msra.mxu0 %v1518
    %1546 = vmatprep.subr.mxu0 0.0
    %1547 = vmatpush1.msra.mxu0 %v1519
    %1548 = vmatprep.subr.mxu0 0.0
    %1549 = vmatpush1.msra.mxu0 %v1520
    %1550 = vmatprep.subr.mxu0 0.0
    %1551 = vmatpush1.msra.mxu0 %v1521
    %1552 = vmatprep.subr.mxu0 0.0
    %1553 = vmatpush1.msra.mxu0 %v1522
    %1554 = vmatprep.subr.mxu0 0.0
    %1555 = vmatpush1.msra.mxu0 %v1523
    %1556 = vmatprep.subr.mxu0 0.0
    %1557 = vmatpush1.msra.mxu0 0.0
    %1558 = vmatprep.subr.mxu0 0.0
    %1559 = vmatpush1.msra.mxu0 0.0
    %1560 = vmatprep.subr.mxu0 0.0
    %1561 = vmatpush1.msra.mxu0 0.0
    %1562 = vmatprep.subr.mxu0 0.0
    %1563 = vmatpush1.msra.mxu0 0.0
    %1564 = vmatprep.subr.mxu0 0.0
    %1565 = vmatpush1.msra.mxu0 0.0
    %1566 = vmatprep.subr.mxu0 0.0
    %1567 = vmatpush1.msra.mxu0 0.0
    %1568 = vmatprep.subr.mxu0 0.0
    %1569 = vmatpush1.msra.mxu0 0.0
    %1570 = vmatprep.subr.mxu0 0.0
    %1571 = vmatpush1.msra.mxu0 0.0
    %1572 = vmatprep.subr.mxu0 0.0
    %1573 = vmatpush1.msra.mxu0 0.0
    %1574 = vmatprep.subr.mxu0 0.0
    %1575 = vmatpush1.msra.mxu0 0.0
    %1576 = vmatprep.subr.mxu0 0.0
    %1577 = vmatpush1.msra.mxu0 0.0
    %1578 = vmatprep.subr.mxu0 0.0
    %1579 = vmatpush1.msra.mxu0 0.0
    %1580 = vmatprep.subr.mxu0 0.0
    %1581 = vmatpush1.msra.mxu0 0.0
    %1582 = vmatprep.subr.mxu0 0.0
    %1583 = vmatpush1.msra.mxu0 0.0
    %1584 = vmatprep.subr.mxu0 0.0
    %1585 = vmatpush1.msra.mxu0 0.0
    %1586 = vmatprep.subr.mxu0 0.0
    %1587 = vmatpush1.msra.mxu0 0.0
    %1588 = vmatprep.mubr.f32.mxu0 0.0
    %1589 = vmatmul.mubr.f32.gmra.mrb[0].mxu0 %v1133
    %v1590 = vpop.f32.mrb[0].mxu0
    %v1591 = vadd.f32 0.0, %v1590
    %v1592 = vpop.f32.mrb[0].mxu0
    %1593 = vmatprep.mubr.f32.mxu0 0.0
    %1594 = vmatmul.mubr.f32.gmra.mrb[0].mxu0 %v1138
    %v1595 = vpop.f32.mrb[0].mxu0
    %v1596 = vadd.f32 0.0, %v1595
    %v1597 = vpop.f32.mrb[0].mxu0
    %1598 = vmatprep.mubr.f32.mxu0 0.0
    %1599 = vmatmul.mubr.f32.gmra.mrb[0].mxu0 %v1143
    %v1600 = vpop.f32.mrb[0].mxu0
    %v1601 = vadd.f32 0.0, %v1600
    %v1602 = vpop.f32.mrb[0].mxu0
    %1603 = vmatprep.mubr.f32.mxu0 0.0
    %1604 = vmatmul.mubr.f32.gmra.mrb[0].mxu0 %v1148
    %v1605 = vpop.f32.mrb[0].mxu0
    %v1606 = vadd.f32 0.0, %v1605
    %v1607 = vpop.f32.mrb[0].mxu0
    %1608 = vdwg.mxu0
    %1609 = vmatprep.subr.mxu0 0.0
    %1610 = vmatpush1.msra.mxu0 %v1151
    %1611 = vmatprep.subr.mxu0 0.0
    %1612 = vmatpush1.msra.mxu0 %v1152
    %1613 = vmatprep.subr.mxu0 0.0
    %1614 = vmatpush1.msra.mxu0 %v1153
    %1615 = vmatprep.subr.mxu0 0.0
    %1616 = vmatpush1.msra.mxu0 %v1154
    %1617 = vmatprep.subr.mxu0 0.0
    %1618 = vmatpush1.msra.mxu0 %v1155
    %1619 = vmatprep.subr.mxu0 0.0
    %1620 = vmatpush1.msra.mxu0 %v1156
    %1621 = vmatprep.subr.mxu0 0.0
    %1622 = vmatpush1.msra.mxu0 %v1157
    %1623 = vmatprep.subr.mxu0 0.0
    %1624 = vmatpush1.msra.mxu0 %v1158
    %1625 = vmatprep.subr.mxu0 0.0
    %1626 = vmatpush1.msra.mxu0 %v1159
    %1627 = vmatprep.subr.mxu0 0.0
    %1628 = vmatpush1.msra.mxu0 %v1160
    %1629 = vmatprep.subr.mxu0 0.0
    %1630 = vmatpush1.msra.mxu0 %v1161
    %1631 = vmatprep.subr.mxu0 0.0
    %1632 = vmatpush1.msra.mxu0 %v1162
    %1633 = vmatprep.subr.mxu0 0.0
    %1634 = vmatpush1.msra.mxu0 %v1163
    %1635 = vmatprep.subr.mxu0 0.0
    %1636 = vmatpush1.msra.mxu0 %v1164
    %1637 = vmatprep.subr.mxu0 0.0
    %1638 = vmatpush1.msra.mxu0 %v1165
    %1639 = vmatprep.subr.mxu0 0.0
    %1640 = vmatpush1.msra.mxu0 %v1166
    %1641 = vmatprep.subr.mxu0 0.0
    %1642 = vmatpush1.msra.mxu0 0.0
    %1643 = vmatprep.subr.mxu0 0.0
    %1644 = vmatpush1.msra.mxu0 0.0
    %1645 = vmatprep.subr.mxu0 0.0
    %1646 = vmatpush1.msra.mxu0 0.0
    %1647 = vmatprep.subr.mxu0 0.0
    %1648 = vmatpush1.msra.mxu0 0.0
    %1649 = vmatprep.subr.mxu0 0.0
    %1650 = vmatpush1.msra.mxu0 0.0
    %1651 = vmatprep.subr.mxu0 0.0
    %1652 = vmatpush1.msra.mxu0 0.0
    %1653 = vmatprep.subr.mxu0 0.0
    %1654 = vmatpush1.msra.mxu0 0.0
    %1655 = vmatprep.subr.mxu0 0.0
    %1656 = vmatpush1.msra.mxu0 0.0
    %1657 = vmatprep.subr.mxu0 0.0
    %1658 = vmatpush1.msra.mxu0 0.0
    %1659 = vmatprep.subr.mxu0 0.0
    %1660 = vmatpush1.msra.mxu0 0.0
    %1661 = vmatprep.subr.mxu0 0.0
    %1662 = vmatpush1.msra.mxu0 0.0
    %1663 = vmatprep.subr.mxu0 0.0
    %1664 = vmatpush1.msra.mxu0 0.0
    %1665 = vmatprep.subr.mxu0 0.0
    %1666 = vmatpush1.msra.mxu0 0.0
    %1667 = vmatprep.subr.mxu0 0.0
    %1668 = vmatpush1.msra.mxu0 0.0
    %1669 = vmatprep.subr.mxu0 0.0
    %1670 = vmatpush1.msra.mxu0 0.0
    %1671 = vmatprep.subr.mxu0 0.0
    %1672 = vmatpush1.msra.mxu0 0.0
    %1673 = vmatprep.mubr.f32.mxu0 0.0
    %1674 = vmatmul.mubr.f32.gmra.mrb[0].mxu0 %v1013
    %v1675 = vpop.f32.mrb[0].mxu0
    %v1676 = vadd.f32 %v1251, %v1675
    %v1677 = vpop.f32.mrb[0].mxu0
    %1678 = vmatprep.mubr.f32.mxu0 0.0
    %1679 = vmatmul.mubr.f32.gmra.mrb[0].mxu0 %v1018
    %v1680 = vpop.f32.mrb[0].mxu0
    %v1681 = vadd.f32 %v1256, %v1680
    %v1682 = vpop.f32.mrb[0].mxu0
    %1683 = vmatprep.mubr.f32.mxu0 0.0
    %1684 = vmatmul.mubr.f32.gmra.mrb[0].mxu0 %v1023
    %v1685 = vpop.f32.mrb[0].mxu0
    %v1686 = vadd.f32 %v1261, %v1685
    %v1687 = vpop.f32.mrb[0].mxu0
    %1688 = vmatprep.mubr.f32.mxu0 0.0
    %1689 = vmatmul.mubr.f32.gmra.mrb[0].mxu0 %v1028
    %v1690 = vpop.f32.mrb[0].mxu0
    %v1691 = vadd.f32 %v1266, %v1690
    %v1692 = vpop.f32.mrb[0].mxu0
    %1693 = vdwg.mxu0
    %1694 = vmatprep.subr.mxu0 0.0
    %1695 = vmatpush1.msra.mxu0 %v1270
    %1696 = vmatprep.subr.mxu0 0.0
    %1697 = vmatpush1.msra.mxu0 %v1271
    %1698 = vmatprep.subr.mxu0 0.0
    %1699 = vmatpush1.msra.mxu0 %v1272
    %1700 = vmatprep.subr.mxu0 0.0
    %1701 = vmatpush1.msra.mxu0 %v1273
    %1702 = vmatprep.subr.mxu0 0.0
    %1703 = vmatpush1.msra.mxu0 %v1274
    %1704 = vmatprep.subr.mxu0 0.0
    %1705 = vmatpush1.msra.mxu0 %v1275
    %1706 = vmatprep.subr.mxu0 0.0
    %1707 = vmatpush1.msra.mxu0 %v1276
    %1708 = vmatprep.subr.mxu0 0.0
    %1709 = vmatpush1.msra.mxu0 %v1277
    %1710 = vmatprep.subr.mxu0 0.0
    %1711 = vmatpush1.msra.mxu0 %v1278
    %1712 = vmatprep.subr.mxu0 0.0
    %1713 = vmatpush1.msra.mxu0 %v1279
    %1714 = vmatprep.subr.mxu0 0.0
    %1715 = vmatpush1.msra.mxu0 %v1280
    %1716 = vmatprep.subr.mxu0 0.0
    %1717 = vmatpush1.msra.mxu0 %v1281
    %1718 = vmatprep.subr.mxu0 0.0
    %1719 = vmatpush1.msra.mxu0 %v1282
    %1720 = vmatprep.subr.mxu0 0.0
    %1721 = vmatpush1.msra.mxu0 %v1283
    %1722 = vmatprep.subr.mxu0 0.0
    %1723 = vmatpush1.msra.mxu0 %v1284
    %1724 = vmatprep.subr.mxu0 0.0
    %1725 = vmatpush1.msra.mxu0 %v1285
    %1726 = vmatprep.subr.mxu0 0.0
    %1727 = vmatpush1.msra.mxu0 0.0
    %1728 = vmatprep.subr.mxu0 0.0
    %1729 = vmatpush1.msra.mxu0 0.0
    %1730 = vmatprep.subr.mxu0 0.0
    %1731 = vmatpush1.msra.mxu0 0.0
    %1732 = vmatprep.subr.mxu0 0.0
    %1733 = vmatpush1.msra.mxu0 0.0
    %1734 = vmatprep.subr.mxu0 0.0
    %1735 = vmatpush1.msra.mxu0 0.0
    %1736 = vmatprep.subr.mxu0 0.0
    %1737 = vmatpush1.msra.mxu0 0.0
    %1738 = vmatprep.subr.mxu0 0.0
    %1739 = vmatpush1.msra.mxu0 0.0
    %1740 = vmatprep.subr.mxu0 0.0
    %1741 = vmatpush1.msra.mxu0 0.0
    %1742 = vmatprep.subr.mxu0 0.0
    %1743 = vmatpush1.msra.mxu0 0.0
    %1744 = vmatprep.subr.mxu0 0.0
    %1745 = vmatpush1.msra.mxu0 0.0
    %1746 = vmatprep.subr.mxu0 0.0
    %1747 = vmatpush1.msra.mxu0 0.0
    %1748 = vmatprep.subr.mxu0 0.0
    %1749 = vmatpush1.msra.mxu0 0.0
    %1750 = vmatprep.subr.mxu0 0.0
    %1751 = vmatpush1.msra.mxu0 0.0
    %1752 = vmatprep.subr.mxu0 0.0
    %1753 = vmatpush1.msra.mxu0 0.0
    %1754 = vmatprep.subr.mxu0 0.0
    %1755 = vmatpush1.msra.mxu0 0.0
    %1756 = vmatprep.subr.mxu0 0.0
    %1757 = vmatpush1.msra.mxu0 0.0
    %1758 = vmatprep.mubr.f32.mxu0 0.0
    %1759 = vmatmul.mubr.f32.gmra.mrb[0].mxu0 %v1053
    %v1760 = vpop.f32.mrb[0].mxu0
    %v1761 = vadd.f32 %v1370, %v1760
    %v1762 = vpop.f32.mrb[0].mxu0
    %1763 = vmatprep.mubr.f32.mxu0 0.0
    %1764 = vmatmul.mubr.f32.gmra.mrb[0].mxu0 %v1058
    %v1765 = vpop.f32.mrb[0].mxu0
    %v1766 = vadd.f32 %v1375, %v1765
    %v1767 = vpop.f32.mrb[0].mxu0
    %1768 = vmatprep.mubr.f32.mxu0 0.0
    %1769 = vmatmul.mubr.f32.gmra.mrb[0].mxu0 %v1063
    %v1770 = vpop.f32.mrb[0].mxu0
    %v1771 = vadd.f32 %v1380, %v1770
    %v1772 = vpop.f32.mrb[0].mxu0
    %1773 = vmatprep.mubr.f32.mxu0 0.0
    %1774 = vmatmul.mubr.f32.gmra.mrb[0].mxu0 %v1068
    %v1775 = vpop.f32.mrb[0].mxu0
    %v1776 = vadd.f32 %v1385, %v1775
    %v1777 = vpop.f32.mrb[0].mxu0
    %1778 = vdwg.mxu0
    %1779 = vmatprep.subr.mxu0 0.0
    %1780 = vmatpush1.msra.mxu0 %v1389
    %1781 = vmatprep.subr.mxu0 0.0
    %1782 = vmatpush1.msra.mxu0 %v1390
    %1783 = vmatprep.subr.mxu0 0.0
    %1784 = vmatpush1.msra.mxu0 %v1391
    %1785 = vmatprep.subr.mxu0 0.0
    %1786 = vmatpush1.msra.mxu0 %v1392
    %1787 = vmatprep.subr.mxu0 0.0
    %1788 = vmatpush1.msra.mxu0 %v1393
    %1789 = vmatprep.subr.mxu0 0.0
    %1790 = vmatpush1.msra.mxu0 %v1394
    %1791 = vmatprep.subr.mxu0 0.0
    %1792 = vmatpush1.msra.mxu0 %v1395
    %1793 = vmatprep.subr.mxu0 0.0
    %1794 = vmatpush1.msra.mxu0 %v1396
    %1795 = vmatprep.subr.mxu0 0.0
    %1796 = vmatpush1.msra.mxu0 %v1397
    %1797 = vmatprep.subr.mxu0 0.0
    %1798 = vmatpush1.msra.mxu0 %v1398
    %1799 = vmatprep.subr.mxu0 0.0
    %1800 = vmatpush1.msra.mxu0 %v1399
    %1801 = vmatprep.subr.mxu0 0.0
    %1802 = vmatpush1.msra.mxu0 %v1400
    %1803 = vmatprep.subr.mxu0 0.0
    %1804 = vmatpush1.msra.mxu0 %v1401
    %1805 = vmatprep.subr.mxu0 0.0
    %1806 = vmatpush1.msra.mxu0 %v1402
    %1807 = vmatprep.subr.mxu0 0.0
    %1808 = vmatpush1.msra.mxu0 %v1403
    %1809 = vmatprep.subr.mxu0 0.0
    %1810 = vmatpush1.msra.mxu0 %v1404
    %1811 = vmatprep.subr.mxu0 0.0
    %1812 = vmatpush1.msra.mxu0 0.0
    %1813 = vmatprep.subr.mxu0 0.0
    %1814 = vmatpush1.msra.mxu0 0.0
    %1815 = vmatprep.subr.mxu0 0.0
    %1816 = vmatpush1.msra.mxu0 0.0
    %1817 = vmatprep.subr.mxu0 0.0
    %1818 = vmatpush1.msra.mxu0 0.0
    %1819 = vmatprep.subr.mxu0 0.0
    %1820 = vmatpush1.msra.mxu0 0.0
    %1821 = vmatprep.subr.mxu0 0.0
    %1822 = vmatpush1.msra.mxu0 0.0
    %1823 = vmatprep.subr.mxu0 0.0
    %1824 = vmatpush1.msra.mxu0 0.0
    %1825 = vmatprep.subr.mxu0 0.0
    %1826 = vmatpush1.msra.mxu0 0.0
    %1827 = vmatprep.subr.mxu0 0.0
    %1828 = vmatpush1.msra.mxu0 0.0
    %1829 = vmatprep.subr.mxu0 0.0
    %1830 = vmatpush1.msra.mxu0 0.0
    %1831 = vmatprep.subr.mxu0 0.0
    %1832 = vmatpush1.msra.mxu0 0.0
    %1833 = vmatprep.subr.mxu0 0.0
    %1834 = vmatpush1.msra.mxu0 0.0
    %1835 = vmatprep.subr.mxu0 0.0
    %1836 = vmatpush1.msra.mxu0 0.0
    %1837 = vmatprep.subr.mxu0 0.0
    %1838 = vmatpush1.msra.mxu0 0.0
    %1839 = vmatprep.subr.mxu0 0.0
    %1840 = vmatpush1.msra.mxu0 0.0
    %1841 = vmatprep.subr.mxu0 0.0
    %1842 = vmatpush1.msra.mxu0 0.0
    %1843 = vmatprep.mubr.f32.mxu0 0.0
    %1844 = vmatmul.mubr.f32.gmra.mrb[0].mxu0 %v1093
    %v1845 = vpop.f32.mrb[0].mxu0
    %v1846 = vadd.f32 %v1489, %v1845
    %v1847 = vpop.f32.mrb[0].mxu0
    %1848 = vmatprep.mubr.f32.mxu0 0.0
    %1849 = vmatmul.mubr.f32.gmra.mrb[0].mxu0 %v1098
    %v1850 = vpop.f32.mrb[0].mxu0
    %v1851 = vadd.f32 %v1494, %v1850
    %v1852 = vpop.f32.mrb[0].mxu0
    %1853 = vmatprep.mubr.f32.mxu0 0.0
    %1854 = vmatmul.mubr.f32.gmra.mrb[0].mxu0 %v1103
    %v1855 = vpop.f32.mrb[0].mxu0
    %v1856 = vadd.f32 %v1499, %v1855
    %v1857 = vpop.f32.mrb[0].mxu0
    %1858 = vmatprep.mubr.f32.mxu0 0.0
    %1859 = vmatmul.mubr.f32.gmra.mrb[0].mxu0 %v1108
    %v1860 = vpop.f32.mrb[0].mxu0
    %v1861 = vadd.f32 %v1504, %v1860
    %v1862 = vpop.f32.mrb[0].mxu0
    %1863 = vdwg.mxu0
    %v1864 = vadd.f32 %v1676, %v1761
    %v1865 = vadd.f32 %v1681, %v1766
    %v1866 = vadd.f32 %v1686, %v1771
    %v1867 = vadd.f32 %v1691, %v1776
    %v1868 = vadd.f32 %v1846, %v1591
    %v1869 = vadd.f32 %v1851, %v1596
    %v1870 = vadd.f32 %v1856, %v1601
    %v1871 = vadd.f32 %v1861, %v1606
    %v1872 = vadd.f32 %v1864, %v1868
    %v1873 = vadd.f32 %v1865, %v1869
    %v1874 = vadd.f32 %v1866, %v1870
    %v1875 = vadd.f32 %v1867, %v1871
    %v1877 = vlaneseq
    %v1878 = vshrl.u32 %v1877, 7
    %v1879 = vsub.s32 0, %v1878
    %v1880 = vrot.slane %v833, %v1879
    %v1882 = vadd.f32 %v1880, %v1872
    %v1883 = vadd.f32 %v1880, %v1873
    %v1884 = vadd.f32 %v1880, %v1874
    %v1885 = vadd.f32 %v1880, %v1875
    %v1886 = vadd.f32 %v1882, 1.0
    %v1887 = vadd.f32 %v1883, 1.0
    %v1888 = vadd.f32 %v1884, 1.0
    %v1889 = vadd.f32 %v1885, 1.0
    %v1890 = vmul.f32 %v55, %v1886
    %v1891 = vmul.f32 %v56, %v1887
    %v1892 = vmul.f32 %v57, %v1888
    %v1893 = vmul.f32 %v58, %v1889
    %1894 = vst [vmem:[#allocation7] sm:$0xff] %v1890
    %1895 = vst [vmem:[#allocation7 + $0x8] sm:$0xff] %v1891
    %1896 = vst [vmem:[#allocation7 + $0x10] sm:$0xff] %v1892
    %1897 = vst [vmem:[#allocation7 + $0x18] sm:$0xff] %v1893
    // Predicated region
    $region38: #{tpu_custom_call.1} parent=1 // pred_check
      _
    $region39: #{tpu_custom_call.1} parent=1 // pred_check_branch
      %1899 = sbr.rel (0) target = $region41
    $region40: #{tpu_custom_call.1} parent=1 // pred_region
      %s1901 = ssub.s32 512, 512
      %1902 = vsyncadd [#allocation4], %s1901
      %s1903 = sshll.u32 [#allocation7], 4
      %s1904 = int_to_ptr.vmem [resolvable:$true] %s1903
      %1909 = dma.vmem_to_hbm [thread:$0]  %s1904, 512, %s7, [#allocation4], 128, 128, 8
    $region41: #{tpu_custom_call.1} parent=1 // pred_fallthru
      _
    // Predicated region
    $region42: #{tpu_custom_call.1} parent=1 // pred_check
      _
    $region43: #{tpu_custom_call.1} parent=1 // pred_check_branch
      %1911 = sbr.rel (0) target = $region45
    $region44: #{tpu_custom_call.1} parent=1 // pred_region
      %1912 = dma.done [#allocation4], 512
    $region45: #{tpu_custom_call.1} parent=1 // pred_fallthru
      _
    %1913 = vsyncpa [#allocation3], 1
    %1914 = vsyncpa [#allocation6], 1
    %1915 = vsyncpa [#allocation4], 1

</llo_original>
